<compile_context>
chip_gen: v5e
topology: v5e:2x2
jax: 0.10.0
libtpu: 0.0.40
codegen_flags: <defaults>
</compile_context>

<pallas_src>
import jax
import jax.numpy as jnp
from jax import lax
from jax.experimental import pallas as pl
from jax.experimental.pallas import tpu as pltpu

EPS = 1e-5


# ---------------------- kernel 1: BN(train stats) + QKV ----------------------
def bn_qkv_kernel(x_ref, g_ref, b_ref, w_ref, qkv_ref):
    """x_ref: (N*T, C); g/b: (1, C); w: (C, 3C); qkv_ref: (N*T, 3C)."""
    x = x_ref[...]
    rows = x.shape[0]
    # Fused single-pass batch statistics (biased variance, training mode).
    s = jnp.sum(x, axis=0, keepdims=True)
    ss = jnp.sum(x * x, axis=0, keepdims=True)
    mean = s * (1.0 / rows)
    var = ss * (1.0 / rows) - mean * mean
    scale = g_ref[...] * lax.rsqrt(var + EPS)
    shift = b_ref[...] - mean * scale
    xn = x * scale + shift
    qkv_ref[...] = jnp.dot(xn, w_ref[...], preferred_element_type=jnp.float32)


# --------------- kernel 2: SDPA per (batch, head, query block) ---------------
def attn_kernel(q_ref, kv_ref, o_ref):
    """q_ref: (1,1,Tq,3*ac); kv_ref: (1,1,T,3*ac); o_ref: (1,1,Tq,ac)."""
    ac = o_ref.shape[-1]
    inv_scale = 1.0 / float(ac) ** 0.5          # PyTorch: / attn_chans**0.5
    qkv_q = q_ref[0, 0]                          # (Tq, 3ac)
    qkv_kv = kv_ref[0, 0]                        # (T,  3ac)
    q = qkv_q[:, 0:ac]
    k = qkv_kv[:, ac:2 * ac]
    v = qkv_kv[:, 2 * ac:3 * ac]
    # (Tq, T) lane-dense score tile; contraction over head dim on the MXU.
    s = lax.dot_general(q, k, (((1,), (1,)), ((), ())),
                        preferred_element_type=jnp.float32) * inv_scale
    s = s - jnp.max(s, axis=-1, keepdims=True)   # stable softmax
    p = jnp.exp(s)
    p = p / jnp.sum(p, axis=-1, keepdims=True)
    out = jnp.dot(p, v, preferred_element_type=jnp.float32)
    o_ref[0, 0] = out.astype(o_ref.dtype)


# ------------------------- kernel 3: output projection -----------------------
def proj_kernel(x_ref, w_ref, b_ref, o_ref):
    """x_ref: (1, T, C); w: (C, C); b: (1, C); o_ref: (1, T, C)."""
    y = jnp.dot(x_ref[0], w_ref[...], preferred_element_type=jnp.float32)
    o_ref[0] = (y + b_ref[...]).astype(o_ref.dtype)


def self_attention(x_nchw, params, attn_chans):
    """Pallas SelfAttention forward. Input/output are NCHW like the module."""
    gamma, beta, wqkv, wproj, bproj = params
    N, C, Hh, Ww = x_nchw.shape
    T = Hh * Ww
    assert C % attn_chans == 0
    heads = C // attn_chans
    ac = attn_chans

    # norm(x).view(n, c, -1).transpose(1, 2) -> rows (N*T), channels on lanes.
    x_seq = jnp.transpose(x_nchw.reshape(N, C, T), (0, 2, 1))
    x_seq = x_seq.reshape(N * T, C).astype(jnp.float32)

    vmem = pl.BlockSpec(memory_space=pltpu.MemorySpace.VMEM)

    # --- BN (global batch stats) fused with the QKV matmul (grid-less: the
    # statistics are a reduction over the whole batch). ----------------------
    qkv = pl.pallas_call(
        bn_qkv_kernel,
        out_shape=jax.ShapeDtypeStruct((N * T, 3 * C), jnp.float32),
        in_specs=[vmem, vmem, vmem, vmem],
        out_specs=vmem,
    )(x_seq, gamma.reshape(1, C), beta.reshape(1, C), wqkv)

    # PyTorch: x.view(n, heads, h*w, attn_chans*3) on the contiguous (N,T,3C)
    # tensor -- an exact row-major reshape (tiny tensor, done by XLA).
    qkv_h = qkv.reshape(N, heads, T, 3 * ac)

    # --- attention, parallel grid over (batch, head, query block) -----------
    tq = 128 if T % 128 == 0 else T
    attn = pl.pallas_call(
        attn_kernel,
        out_shape=jax.ShapeDtypeStruct((N, heads, T, ac), jnp.float32),
        grid=(N, heads, T // tq),
        in_specs=[
            pl.BlockSpec((1, 1, tq, 3 * ac), lambda b, h, t: (b, h, t, 0)),
            pl.BlockSpec((1, 1, T, 3 * ac), lambda b, h, t: (b, h, 0, 0)),
        ],
        out_specs=pl.BlockSpec((1, 1, tq, ac), lambda b, h, t: (b, h, t, 0)),
        compiler_params=pltpu.CompilerParams(
            dimension_semantics=("parallel", "parallel", "parallel")),
    )(qkv_h, qkv_h)

    # PyTorch: x.view(n, h*w, heads*attn_chans) -- exact row-major reshape.
    ctx = attn.reshape(N, T, C)

    # --- output projection, parallel over batch ------------------------------
    y = pl.pallas_call(
        proj_kernel,
        out_shape=jax.ShapeDtypeStruct((N, T, C), jnp.float32),
        grid=(N,),
        in_specs=[
            pl.BlockSpec((1, T, C), lambda b: (b, 0, 0)),
            pl.BlockSpec((C, C), lambda b: (0, 0)),
            pl.BlockSpec((1, C), lambda b: (0, 0)),
        ],
        out_specs=pl.BlockSpec((1, T, C), lambda b: (b, 0, 0)),
        compiler_params=pltpu.CompilerParams(dimension_semantics=("parallel",)),
    )(ctx, wproj, bproj.reshape(1, C))

    # .transpose(1, 2).view(n, c, h, w)
    return jnp.transpose(y, (0, 2, 1)).reshape(N, C, Hh, Ww)


# ----------------------------- pure-JAX reference ----------------------------
def self_attention_ref(x, params, attn_chans):
    gamma, beta, wqkv, wproj, bproj = params
    N, C, Hh, Ww = x.shape
    T = Hh * Ww
    heads = C // attn_chans
    ac = attn_chans
    hi = lax.Precision.HIGHEST

    mean = jnp.mean(x, axis=(0, 2, 3), keepdims=True)
    var = jnp.mean((x - mean) ** 2, axis=(0, 2, 3), keepdims=True)
    xn = (x - mean) * lax.rsqrt(var + EPS)
    xn = xn * gamma.reshape(1, C, 1, 1) + beta.reshape(1, C, 1, 1)

    xs = jnp.transpose(xn.reshape(N, C, T), (0, 2, 1))                  # (N,T,C)
    qkv = jnp.einsum('ntc,cd->ntd', xs, wqkv, precision=hi)             # (N,T,3C)
    qkv = qkv.reshape(N, heads, T, 3 * ac)                              # torch .view
    q, k, v = qkv[..., :ac], qkv[..., ac:2 * ac], qkv[..., 2 * ac:]
    s = jnp.einsum('nhtd,nhsd->nhts', q, k, precision=hi) / (ac ** 0.5)
    p = jax.nn.softmax(s, axis=-1)
    o = jnp.einsum('nhts,nhsd->nhtd', p, v, precision=hi)
    o = o.reshape(N, T, C)                                              # torch .view
    y = jnp.einsum('ntc,cd->ntd', o, wproj, precision=hi) + bproj
    return jnp.transpose(y, (0, 2, 1)).reshape(N, C, Hh, Ww)


def init_params(key, n_embd):
    k = jax.random.split(key, 5)
    gamma = 1.0 + 0.1 * jax.random.normal(k[0], (n_embd,), jnp.float32)
    beta = 0.1 * jax.random.normal(k[1], (n_embd,), jnp.float32)
    # Linear weights stored pre-transposed (y = x @ w + b), bias-free qkv.
    wqkv = jax.random.normal(k[2], (n_embd, 3 * n_embd), jnp.float32) / n_embd ** 0.5
    wproj = jax.random.normal(k[3], (n_embd, n_embd), jnp.float32) / n_embd ** 0.5
    bproj = 0.1 * jax.random.normal(k[4], (n_embd,), jnp.float32)
    return (gamma, beta, wqkv, wproj, bproj)


if __name__ == "__main__":
    key = jax.random.PRNGKey(0)
    kx1, kp1, kx2, kp2 = jax.random.split(key, 4)

    fwd = jax.jit(self_attention, static_argnames="attn_chans")

    # SelfAttention(n_embd=32, attn_chans=8) -> heads=4, seq = 16*16 = 256
    N, C, Hh, Ww, ac = 2, 32, 16, 16, 8
    x = jax.random.normal(kx1, (N, C, Hh, Ww), jnp.float32)
    params = init_params(kp1, C)
    y = jax.block_until_ready(fwd(x, params, attn_chans=ac))
    y_ref = self_attention_ref(x, params, ac)
    assert y.shape == (N, C, Hh, Ww)
    assert jnp.allclose(y, y_ref, atol=2e-2, rtol=2e-2), \
        float(jnp.max(jnp.abs(y - y_ref)))

    # SelfAttention(n_embd=32, attn_chans=16) -> heads=2, seq = 8*8 = 64
    N2, C2, H2, W2, ac2 = 2, 32, 8, 8, 16
    x2 = jax.random.normal(kx2, (N2, C2, H2, W2), jnp.float32)
    params2 = init_params(kp2, C2)
    y2 = jax.block_until_ready(fwd(x2, params2, attn_chans=ac2))
    y2_ref = self_attention_ref(x2, params2, ac2)
    assert jnp.allclose(y2, y2_ref, atol=2e-2, rtol=2e-2), \
        float(jnp.max(jnp.abs(y2 - y2_ref)))

    print("KERNEL_OK")
</pallas_src>

<mosaic_0001>
module attributes {stable_mosaic.version = 11 : i64} {
  func.func @bn_qkv_kernel(%arg0: memref<512x32xf32, #tpu.memory_space<vmem>>, %arg1: memref<1x32xf32, #tpu.memory_space<vmem>>, %arg2: memref<1x32xf32, #tpu.memory_space<vmem>>, %arg3: memref<32x96xf32, #tpu.memory_space<vmem>>, %arg4: memref<512x96xf32, #tpu.memory_space<vmem>>) attributes {dimension_semantics = [], scalar_prefetch = 0 : i64, scratch_operands = 0 : i64, tpu.core_type = #tpu.core_type<tc>} {
    %c0 = arith.constant 0 : index
    %c0_0 = arith.constant 0 : index
    %0 = vector.load %arg0[%c0, %c0_0] : memref<512x32xf32, #tpu.memory_space<vmem>>, vector<512x32xf32>
    %cst = arith.constant dense<0.000000e+00> : vector<32xf32>
    %1 = vector.multi_reduction <add>, %0, %cst [0] : vector<512x32xf32> to vector<32xf32>
    %2 = vector.shape_cast %1 : vector<32xf32> to vector<1x32xf32>
    %3 = arith.mulf %0, %0 : vector<512x32xf32>
    %cst_1 = arith.constant dense<0.000000e+00> : vector<32xf32>
    %4 = vector.multi_reduction <add>, %3, %cst_1 [0] : vector<512x32xf32> to vector<32xf32>
    %5 = vector.shape_cast %4 : vector<32xf32> to vector<1x32xf32>
    %cst_2 = arith.constant 0.001953125 : f32
    %6 = vector.broadcast %cst_2 : f32 to vector<1x32xf32>
    %7 = arith.mulf %2, %6 : vector<1x32xf32>
    %cst_3 = arith.constant 0.001953125 : f32
    %8 = vector.broadcast %cst_3 : f32 to vector<1x32xf32>
    %9 = arith.mulf %5, %8 : vector<1x32xf32>
    %10 = arith.mulf %7, %7 : vector<1x32xf32>
    %11 = arith.subf %9, %10 : vector<1x32xf32>
    %c0_4 = arith.constant 0 : index
    %c0_5 = arith.constant 0 : index
    %12 = vector.load %arg1[%c0_4, %c0_5] : memref<1x32xf32, #tpu.memory_space<vmem>>, vector<1x32xf32>
    %cst_6 = arith.constant 9.99999974E-6 : f32
    %13 = vector.broadcast %cst_6 : f32 to vector<1x32xf32>
    %14 = arith.addf %11, %13 : vector<1x32xf32>
    %15 = math.rsqrt %14 : vector<1x32xf32>
    %16 = arith.mulf %12, %15 : vector<1x32xf32>
    %c0_7 = arith.constant 0 : index
    %c0_8 = arith.constant 0 : index
    %17 = vector.load %arg2[%c0_7, %c0_8] : memref<1x32xf32, #tpu.memory_space<vmem>>, vector<1x32xf32>
    %18 = arith.mulf %7, %16 : vector<1x32xf32>
    %19 = arith.subf %17, %18 : vector<1x32xf32>
    %20 = vector.broadcast %16 : vector<1x32xf32> to vector<512x32xf32>
    %21 = arith.mulf %0, %20 : vector<512x32xf32>
    %22 = vector.broadcast %19 : vector<1x32xf32> to vector<512x32xf32>
    %23 = arith.addf %21, %22 : vector<512x32xf32>
    %c0_9 = arith.constant 0 : index
    %c0_10 = arith.constant 0 : index
    %24 = vector.load %arg3[%c0_9, %c0_10] : memref<32x96xf32, #tpu.memory_space<vmem>>, vector<32x96xf32>
    %cst_11 = arith.constant dense<0.000000e+00> : vector<512x96xf32>
    %25 = tpu.matmul %23, %24, %cst_11 {dimension_numbers = #tpu.dot_dimension_numbers<[1], [0], [0], [1], [0, 0, 1, 1], [], []>} : vector<512x32xf32>, vector<32x96xf32>, vector<512x96xf32> -> vector<512x96xf32>
    %c0_12 = arith.constant 0 : index
    %c0_13 = arith.constant 0 : index
    %26 = vector.load %arg4[%c0_12, %c0_13] : memref<512x96xf32, #tpu.memory_space<vmem>>, vector<512x96xf32>
    tpu.vector_store %arg4[%c0_12, %c0_13], %25 {strides = array<i32>} : memref<512x96xf32, #tpu.memory_space<vmem>>, vector<512x96xf32>,
    return
  }
}

module attributes {stable_mosaic.version = 11 : i64} {
  func.func @attn_kernel(%arg0: i32, %arg1: i32, %arg2: i32, %arg3: memref<1x1x128x24xf32, #tpu.memory_space<vmem>>, %arg4: memref<1x1x256x24xf32, #tpu.memory_space<vmem>>, %arg5: memref<1x1x128x8xf32, #tpu.memory_space<vmem>>) attributes {dimension_semantics = [#tpu.dimension_semantics<parallel>, #tpu.dimension_semantics<parallel>, #tpu.dimension_semantics<parallel>], iteration_bounds = array<i64: 2, 4, 2>, scalar_prefetch = 0 : i64, scratch_operands = 0 : i64, tpu.core_type = #tpu.core_type<tc>, window_params = [{transform_indices = @transform_0, window_bounds = array<i64: 1, 1, 128, 24>}, {transform_indices = @transform_1, window_bounds = array<i64: 1, 1, 256, 24>}, {transform_indices = @transform_2, window_bounds = array<i64: 1, 1, 128, 8>}]} {
    %c0 = arith.constant 0 : index
    %c0_0 = arith.constant 0 : index
    %c0_1 = arith.constant 0 : index
    %c0_2 = arith.constant 0 : index
    %0 = vector.load %arg3[%c0, %c0_0, %c0_1, %c0_2] : memref<1x1x128x24xf32, #tpu.memory_space<vmem>>, vector<1x1x128x24xf32>
    %1 = vector.shape_cast %0 : vector<1x1x128x24xf32> to vector<128x24xf32>
    %c0_3 = arith.constant 0 : index
    %c0_4 = arith.constant 0 : index
    %c0_5 = arith.constant 0 : index
    %c0_6 = arith.constant 0 : index
    %2 = vector.load %arg4[%c0_3, %c0_4, %c0_5, %c0_6] : memref<1x1x256x24xf32, #tpu.memory_space<vmem>>, vector<1x1x256x24xf32>
    %3 = vector.shape_cast %2 : vector<1x1x256x24xf32> to vector<256x24xf32>
    %4 = vector.extract_strided_slice %1 {offsets = [0, 0], sizes = [128, 8], strides = [1, 1]} : vector<128x24xf32> to vector<128x8xf32>
    %5 = vector.extract_strided_slice %3 {offsets = [0, 8], sizes = [256, 8], strides = [1, 1]} : vector<256x24xf32> to vector<256x8xf32>
    %6 = vector.extract_strided_slice %3 {offsets = [0, 16], sizes = [256, 8], strides = [1, 1]} : vector<256x24xf32> to vector<256x8xf32>
    %cst = arith.constant dense<0.000000e+00> : vector<128x256xf32>
    %7 = tpu.matmul %4, %5, %cst {dimension_numbers = #tpu.dot_dimension_numbers<[1], [1], [0], [0], [0, 0, 1, 0], [], []>} : vector<128x8xf32>, vector<256x8xf32>, vector<128x256xf32> -> vector<128x256xf32>
    %cst_7 = arith.constant 0.353553385 : f32
    %8 = vector.broadcast %cst_7 : f32 to vector<128x256xf32>
    %9 = arith.mulf %7, %8 : vector<128x256xf32>
    %cst_8 = arith.constant dense<0xFF800000> : vector<128xf32>
    %10 = vector.multi_reduction <maximumf>, %9, %cst_8 [1] : vector<128x256xf32> to vector<128xf32>
    %11 = vector.shape_cast %10 : vector<128xf32> to vector<128x1xf32>
    %12 = vector.broadcast %11 : vector<128x1xf32> to vector<128x256xf32>
    %13 = arith.subf %9, %12 : vector<128x256xf32>
    %14 = math.exp %13 : vector<128x256xf32>
    %cst_9 = arith.constant dense<0.000000e+00> : vector<128xf32>
    %15 = vector.multi_reduction <add>, %14, %cst_9 [1] : vector<128x256xf32> to vector<128xf32>
    %16 = vector.shape_cast %15 : vector<128xf32> to vector<128x1xf32>
    %17 = vector.broadcast %16 : vector<128x1xf32> to vector<128x256xf32>
    %18 = arith.divf %14, %17 : vector<128x256xf32>
    %cst_10 = arith.constant dense<0.000000e+00> : vector<128x8xf32>
    %19 = tpu.matmul %18, %6, %cst_10 {dimension_numbers = #tpu.dot_dimension_numbers<[1], [0], [0], [1], [0, 0, 1, 1], [], []>} : vector<128x256xf32>, vector<256x8xf32>, vector<128x8xf32> -> vector<128x8xf32>
    %c0_11 = arith.constant 0 : index
    %c0_12 = arith.constant 0 : index
    %c0_13 = arith.constant 0 : index
    %c0_14 = arith.constant 0 : index
    %20 = vector.load %arg5[%c0_11, %c0_12, %c0_13, %c0_14] : memref<1x1x128x8xf32, #tpu.memory_space<vmem>>, vector<1x1x128x8xf32>
    %21 = vector.shape_cast %20 : vector<1x1x128x8xf32> to vector<128x8xf32>
    %22 = vector.shape_cast %19 : vector<128x8xf32> to vector<1x1x128x8xf32>
    tpu.vector_store %arg5[%c0_11, %c0_12, %c0_13, %c0_14], %22 {strides = array<i32>} : memref<1x1x128x8xf32, #tpu.memory_space<vmem>>, vector<1x1x128x8xf32>,
    return
  }
  func.func @transform_0(%arg0: i32, %arg1: i32, %arg2: i32) -> (i32, i32, i32, i32) {
    %c0_i32 = arith.constant 0 : i32
    %c0_i32_0 = arith.constant 0 : i32
    return %arg0, %arg1, %arg2, %c0_i32 : i32, i32, i32, i32
  }
  func.func @transform_1(%arg0: i32, %arg1: i32, %arg2: i32) -> (i32, i32, i32, i32) {
    %c0_i32 = arith.constant 0 : i32
    %c0_i32_0 = arith.constant 0 : i32
    %c0_i32_1 = arith.constant 0 : i32
    return %arg0, %arg1, %c0_i32, %c0_i32_0 : i32, i32, i32, i32
  }
  func.func @transform_2(%arg0: i32, %arg1: i32, %arg2: i32) -> (i32, i32, i32, i32) {
    %c0_i32 = arith.constant 0 : i32
    %c0_i32_0 = arith.constant 0 : i32
    return %arg0, %arg1, %arg2, %c0_i32 : i32, i32, i32, i32
  }
}

module attributes {stable_mosaic.version = 11 : i64} {
  func.func @proj_kernel(%arg0: i32, %arg1: memref<1x256x32xf32, #tpu.memory_space<vmem>>, %arg2: memref<32x32xf32, #tpu.memory_space<vmem>>, %arg3: memref<1x32xf32, #tpu.memory_space<vmem>>, %arg4: memref<1x256x32xf32, #tpu.memory_space<vmem>>) attributes {dimension_semantics = [#tpu.dimension_semantics<parallel>], iteration_bounds = array<i64: 2>, scalar_prefetch = 0 : i64, scratch_operands = 0 : i64, tpu.core_type = #tpu.core_type<tc>, window_params = [{transform_indices = @transform_0, window_bounds = array<i64: 1, 256, 32>}, {pipeline_mode = #tpu.pipeline_mode<synchronous>, transform_indices = @transform_1, window_bounds = array<i64: 32, 32>}, {pipeline_mode = #tpu.pipeline_mode<synchronous>, transform_indices = @transform_2, window_bounds = array<i64: 1, 32>}, {transform_indices = @transform_3, window_bounds = array<i64: 1, 256, 32>}]} {
    %c0 = arith.constant 0 : index
    %c0_0 = arith.constant 0 : index
    %c0_1 = arith.constant 0 : index
    %0 = vector.load %arg1[%c0, %c0_0, %c0_1] : memref<1x256x32xf32, #tpu.memory_space<vmem>>, vector<1x256x32xf32>
    %1 = vector.shape_cast %0 : vector<1x256x32xf32> to vector<256x32xf32>
    %c0_2 = arith.constant 0 : index
    %c0_3 = arith.constant 0 : index
    %2 = vector.load %arg2[%c0_2, %c0_3] : memref<32x32xf32, #tpu.memory_space<vmem>>, vector<32x32xf32>
    %cst = arith.constant dense<0.000000e+00> : vector<256x32xf32>
    %3 = tpu.matmul %1, %2, %cst {dimension_numbers = #tpu.dot_dimension_numbers<[1], [0], [0], [1], [0, 0, 1, 1], [], []>} : vector<256x32xf32>, vector<32x32xf32>, vector<256x32xf32> -> vector<256x32xf32>
    %c0_4 = arith.constant 0 : index
    %c0_5 = arith.constant 0 : index
    %4 = vector.load %arg3[%c0_4, %c0_5] : memref<1x32xf32, #tpu.memory_space<vmem>>, vector<1x32xf32>
    %5 = vector.broadcast %4 : vector<1x32xf32> to vector<256x32xf32>
    %6 = arith.addf %3, %5 : vector<256x32xf32>
    %c0_6 = arith.constant 0 : index
    %c0_7 = arith.constant 0 : index
    %c0_8 = arith.constant 0 : index
    %7 = vector.load %arg4[%c0_6, %c0_7, %c0_8] : memref<1x256x32xf32, #tpu.memory_space<vmem>>, vector<1x256x32xf32>
    %8 = vector.shape_cast %7 : vector<1x256x32xf32> to vector<256x32xf32>
    %9 = vector.shape_cast %6 : vector<256x32xf32> to vector<1x256x32xf32>
    tpu.vector_store %arg4[%c0_6, %c0_7, %c0_8], %9 {strides = array<i32>} : memref<1x256x32xf32, #tpu.memory_space<vmem>>, vector<1x256x32xf32>,
    return
  }
  func.func @transform_0(%arg0: i32) -> (i32, i32, i32) {
    %c0_i32 = arith.constant 0 : i32
    %c0_i32_0 = arith.constant 0 : i32
    %c0_i32_1 = arith.constant 0 : i32
    return %arg0, %c0_i32, %c0_i32_0 : i32, i32, i32
  }
  func.func @transform_1(%arg0: i32) -> (i32, i32) {
    %c0_i32 = arith.constant 0 : i32
    %c0_i32_0 = arith.constant 0 : i32
    %c0_i32_1 = arith.constant 0 : i32
    return %c0_i32, %c0_i32_0 : i32, i32
  }
  func.func @transform_2(%arg0: i32) -> (i32, i32) {
    %c0_i32 = arith.constant 0 : i32
    %c0_i32_0 = arith.constant 0 : i32
    %c0_i32_1 = arith.constant 0 : i32
    return %c0_i32, %c0_i32_0 : i32, i32
  }
  func.func @transform_3(%arg0: i32) -> (i32, i32, i32) {
    %c0_i32 = arith.constant 0 : i32
    %c0_i32_0 = arith.constant 0 : i32
    %c0_i32_1 = arith.constant 0 : i32
    return %arg0, %c0_i32, %c0_i32_0 : i32, i32, i32
  }
}

</mosaic_0001>

<llo_original>
// kernel: self_attention.4
$region0: #{self_attention.4}
  #allocation0 [shape = 'u32[]', space=smem, size = 0x4, offset = 0x4, fixed_abs, tag = 'smem constant byte address 0x4 - core index']
  #allocation1 [shape = 'u32[72,128]{1,0:T(1,128)}', space=vmem, size = 0x9000, scoped, tag = 'internal scratch']
  %s0 = inlined_call_operand.vmem [shape: f32[2,4,256,24], index: 0, kind: input, shape index: {}, may-alias: {0,1}]
  %s1 = inlined_call_operand.vmem [shape: f32[2,4,256,24], index: 1, kind: input, shape index: {}, may-alias: {0,1}]
  %s2 = inlined_call_operand.vmem [shape: f32[2,4,256,8], index: 2, kind: output, shape index: {}]
  %s3 = sld [smem:[#allocation0]]
  $region41: #{self_attention.4} parent=0
    _
  %s5 = ssub.s32 1, %s3
  %s6 = scalar_select 0, %s5, %s3
  loop: start=0, step=1, limit=18
  $region2: #{self_attention.4} parent=0 // loop_pre_header
    _
  $region3: #{self_attention.4} parent=0 // loop_header
    %s8 = sphi 0, %s12
    %p9 = scmp.ge.s32.totalorder %s8, 18
    %s15 = sphi 0, %s34
    %s16 = sphi 0, %s30
    %s17 = sphi 0, %s26
    %s18 = sphi 0, %s15
    %s19 = sphi 0, %s16
    %s20 = sphi 0, %s17
    %s21 = sphi 0, %s18
    %s22 = sphi 0, %s19
    %s23 = sphi 0, %s20
    %s41 = sphi 0, %s43
    %s44 = sphi 0, %s41
    %s45 = sphi 0, %s44
    %s61 = sphi 0, %s45
    %s69 = sphi 0, %s71
    %s72 = sphi 0, %s69
    %s73 = sphi 0, %s72
    %s89 = sphi 0, %s73
    %s99 = sphi 0, %s101
    %s102 = sphi 0, %s99
    %s103 = sphi 0, %s102
    %s119 = sphi 0, %s103
  $region4: #{self_attention.4} parent=0 // loop_header_branch
    %11 = sbr.rel (%p9) target = $region8
  $region5: #{self_attention.4} parent=0 // loop_body
    %s13 = ssub.s32 %s8, 1
    %s14 = ssub.s32 %s8, 2
    %s24 = sadd.s32 1, %s17
    %p25 = scmp.ge.s32.totalorder %s24, 2
    %s26 = scalar_select %p25, 0, %s24
    %s27 = sadd.s32 1, %s16
    %s28 = scalar_select %p25, %s27, %s16
    %p29 = scmp.ge.s32.totalorder %s28, 4
    %s30 = scalar_select %p29, 0, %s28
    %s31 = sadd.s32 1, %s15
    %s32 = scalar_select %p29, %s31, %s15
    %p33 = scmp.ge.s32.totalorder %s32, 2
    %s34 = scalar_select %p33, 0, %s32
    %s35 = ssub.s32 %s15, %s34
    %s36 = ssub.s32 %s16, %s30
    %s37 = sor.u32 %s35, %s36
    %s38 = ssub.s32 %s17, %s26
    %s39 = sor.u32 %s37, %s38
    %p40 = scmp.eq.s32.totalorder %s39, 0
    %s42 = sadd.s32 %s41, 1
    %s43 = scalar_select %p40, %s41, %s42
    %p46 = pneg %p40
    %p47 = scmp.eq.s32.totalorder %s8, 15
    %p48 = por %p46, %p47
    %p49 = scmp.ne.s32.totalorder %s41, %s44
    %p50 = scmp.eq.s32.totalorder %s8, 0
    %p51 = por %p49, %p50
    %p52 = scmp.ne.s32.totalorder %s41, %s44
    %p53 = scmp.eq.s32.totalorder %s13, 15
    %p54 = por %p52, %p53
    %p55 = scmp.ne.s32.totalorder %s44, %s45
    %p56 = scmp.eq.s32.totalorder %s13, 0
    %p57 = por %p55, %p56
    %p58 = scmp.ne.s32.totalorder %s44, %s45
    %p59 = scmp.eq.s32.totalorder %s14, 15
    %p60 = por %p58, %p59
    %p62 = scmp.ne.s32.totalorder %s45, %s61
    %p63 = scmp.eq.s32.totalorder %s14, 0
    %p64 = por %p62, %p63
    %s65 = ssub.s32 %s15, %s34
    %s66 = ssub.s32 %s16, %s30
    %s67 = sor.u32 %s65, %s66
    %p68 = scmp.eq.s32.totalorder %s67, 0
    %s70 = sadd.s32 %s69, 1
    %s71 = scalar_select %p68, %s69, %s70
    %p74 = pneg %p68
    %p75 = scmp.eq.s32.totalorder %s8, 15
    %p76 = por %p74, %p75
    %p77 = scmp.ne.s32.totalorder %s69, %s72
    %p78 = scmp.eq.s32.totalorder %s8, 0
    %p79 = por %p77, %p78
    %p80 = scmp.ne.s32.totalorder %s69, %s72
    %p81 = scmp.eq.s32.totalorder %s13, 15
    %p82 = por %p80, %p81
    %p83 = scmp.ne.s32.totalorder %s72, %s73
    %p84 = scmp.eq.s32.totalorder %s13, 0
    %p85 = por %p83, %p84
    %p86 = scmp.ne.s32.totalorder %s72, %s73
    %p87 = scmp.eq.s32.totalorder %s14, 15
    %p88 = por %p86, %p87
    %p90 = scmp.ne.s32.totalorder %s73, %s89
    %p91 = scmp.eq.s32.totalorder %s14, 0
    %p92 = por %p90, %p91
    %s93 = ssub.s32 %s15, %s34
    %s94 = ssub.s32 %s16, %s30
    %s95 = sor.u32 %s93, %s94
    %s96 = ssub.s32 %s17, %s26
    %s97 = sor.u32 %s95, %s96
    %p98 = scmp.eq.s32.totalorder %s97, 0
    %s100 = sadd.s32 %s99, 1
    %s101 = scalar_select %p98, %s99, %s100
    %p104 = pneg %p98
    %p105 = scmp.eq.s32.totalorder %s8, 15
    %p106 = por %p104, %p105
    %p107 = scmp.ne.s32.totalorder %s99, %s102
    %p108 = scmp.eq.s32.totalorder %s8, 0
    %p109 = por %p107, %p108
    %p110 = scmp.ne.s32.totalorder %s99, %s102
    %p111 = scmp.eq.s32.totalorder %s13, 15
    %p112 = por %p110, %p111
    %p113 = scmp.ne.s32.totalorder %s102, %s103
    %p114 = scmp.eq.s32.totalorder %s13, 0
    %p115 = por %p113, %p114
    %p116 = scmp.ne.s32.totalorder %s102, %s103
    %p117 = scmp.eq.s32.totalorder %s14, 15
    %p118 = por %p116, %p117
    %p120 = scmp.ne.s32.totalorder %s103, %s119
    %p121 = scmp.eq.s32.totalorder %s14, 0
    %p122 = por %p120, %p121
    %p123 = scmp.le.s32.totalorder 1, %s8
    %p124 = scmp.lt.s32.totalorder %s8, 17
    %p125 = pnand %p123, %p124
    %p126 = pneg %p125
    // Predicated region
    $region9: #{self_attention.4} parent=5 // pred_check
      _
    $region10: #{self_attention.4} parent=5 // pred_check_branch
      %128 = sbr.rel (%p125) target = $region12
    $region11: #{self_attention.4} parent=5 // pred_region
      %s129 = ssub.s32 %s8, 1
    $region12: #{self_attention.4} parent=5 // pred_fallthru
      _
    %p130 = scmp.lt.s32.totalorder %s8, 16
    // Predicated region
    $region13: #{self_attention.4} parent=5 // pred_check
      %p131 = pneg %p130
    $region14: #{self_attention.4} parent=5 // pred_check_branch
      %133 = sbr.rel (%p131) target = $region16
    $region15: #{self_attention.4} parent=5 // pred_region
      // Predicated region
      $region17: #{self_attention.4} parent=15 // pred_check
        %p134 = pneg %p51
      $region18: #{self_attention.4} parent=15 // pred_check_branch
        %136 = sbr.rel (%p134) target = $region20
      $region19: #{self_attention.4} parent=15 // pred_region
        %s137 = smul.u32 16, %s17
        %p138 = scmp.lt.s32.totalorder %s15, 1
        %s139 = scalar_select %p138, %s15, 1
        %p140 = scmp.lt.s32.totalorder %s16, 3
        %s141 = scalar_select %p140, %s16, 3
        %p142 = scmp.lt.s32.totalorder %s137, 31
        %s143 = scalar_select %p142, %s137, 31
        %s144 = smul.addr %s141, 32
        %s145 = sadd.s32 %s143, %s144
        %s146 = smul.addr %s139, 128
        %s147 = sadd.s32 %s145, %s146
        %s148 = smul.addr %s147, 8
        %s149 = scalar_lea.vmem %s0, %s148
        %s150 = smul.u32 16, %s17
      $region20: #{self_attention.4} parent=15 // pred_fallthru
        _
      // Predicated region
      $region21: #{self_attention.4} parent=15 // pred_check
        %p151 = pneg %p79
      $region22: #{self_attention.4} parent=15 // pred_check_branch
        %153 = sbr.rel (%p151) target = $region24
      $region23: #{self_attention.4} parent=15 // pred_region
        %p154 = scmp.lt.s32.totalorder %s15, 1
        %s155 = scalar_select %p154, %s15, 1
        %p156 = scmp.lt.s32.totalorder %s16, 3
        %s157 = scalar_select %p156, %s16, 3
        %s158 = smul.addr %s157, 32
        %s159 = smul.addr %s155, 128
        %s160 = sadd.s32 %s158, %s159
        %s161 = smul.addr %s160, 8
        %s162 = scalar_lea.vmem %s1, %s161
      $region24: #{self_attention.4} parent=15 // pred_fallthru
        _
    $region16: #{self_attention.4} parent=5 // pred_fallthru
      _
    %p163 = scmp.le.s32.totalorder 1, %s8
    %p164 = scmp.lt.s32.totalorder %s8, 17
    %p165 = pnand %p163, %p164
    %p166 = pneg %p165
    // Predicated region
    $region25: #{self_attention.4} parent=5 // pred_check
      _
    $region26: #{self_attention.4} parent=5 // pred_check_branch
      %168 = sbr.rel (%p165) target = $region28
    $region27: #{self_attention.4} parent=5 // pred_region
      %s169 = ssub.s32 %s8, 1
      %s170 = smul.u32 16, %s20
      %p171 = scmp.lt.s32.totalorder %s18, 1
      %s172 = scalar_select %p171, %s18, 1
      %p173 = scmp.lt.s32.totalorder %s19, 3
      %s174 = scalar_select %p173, %s19, 3
      %p175 = scmp.lt.s32.totalorder %s170, 31
      %s176 = scalar_select %p175, %s170, 31
      %s177 = smul.addr %s174, 32
      %s178 = sadd.s32 %s176, %s177
      %s179 = smul.addr %s172, 128
      %s180 = sadd.s32 %s178, %s179
      %s181 = smul.addr %s180, 8
      %s182 = scalar_lea.vmem %s0, %s181
      %p183 = pneg %p57
      %p184 = pneg %p54
      %p185 = scmp.lt.s32.totalorder %s18, 1
      %s186 = scalar_select %p185, %s18, 1
      %p187 = scmp.lt.s32.totalorder %s19, 3
      %s188 = scalar_select %p187, %s19, 3
      %s189 = smul.addr %s188, 32
      %s190 = smul.addr %s186, 128
      %s191 = sadd.s32 %s189, %s190
      %s192 = smul.addr %s191, 8
      %s193 = scalar_lea.vmem %s1, %s192
      %p194 = pneg %p85
      %p195 = pneg %p82
      %p196 = pneg %p115
      %p197 = pneg %p112
      %s198 = smul.u32 16, %s20
      %p199 = scmp.lt.s32.totalorder %s18, 1
      %s200 = scalar_select %p199, %s18, 1
      %p201 = scmp.lt.s32.totalorder %s19, 3
      %s202 = scalar_select %p201, %s19, 3
      %p203 = scmp.lt.s32.totalorder %s198, 31
      %s204 = scalar_select %p203, %s198, 31
      %s205 = smul.addr %s202, 32
      %s206 = sadd.s32 %s204, %s205
      %s207 = smul.addr %s200, 128
      %s208 = sadd.s32 %s206, %s207
      %s209 = smul.addr %s208, 8
      %s210 = scalar_lea.vmem %s2, %s209
      %s211 = smul.u32 16, %s20
      %p212 = scmp.lt.s32.totalorder %s18, 1
      %s213 = scalar_select %p212, %s18, 1
      %p214 = scmp.lt.s32.totalorder %s19, 3
      %s215 = scalar_select %p214, %s19, 3
      %p216 = scmp.lt.s32.totalorder %s211, 31
      %s217 = scalar_select %p216, %s211, 31
      %s218 = smul.addr %s215, 32
      %s219 = sadd.s32 %s217, %s218
      %s220 = smul.addr %s213, 128
      %s221 = sadd.s32 %s219, %s220
      %s222 = smul.addr %s221, 8
      %s223 = scalar_lea.vmem %s0, %s222
      %s224 = smul.u32 16, %s20
      %p225 = scmp.lt.s32.totalorder %s18, 1
      %s226 = scalar_select %p225, %s18, 1
      %p227 = scmp.lt.s32.totalorder %s19, 3
      %s228 = scalar_select %p227, %s19, 3
      %s229 = smul.addr %s228, 32
      %s230 = smul.addr %s226, 128
      %s231 = sadd.s32 %s229, %s230
      %s232 = smul.addr %s231, 8
      %s233 = scalar_lea.vmem %s1, %s232
      %s234 = smul.u32 16, %s20
      %p235 = scmp.lt.s32.totalorder %s18, 1
      %s236 = scalar_select %p235, %s18, 1
      %p237 = scmp.lt.s32.totalorder %s19, 3
      %s238 = scalar_select %p237, %s19, 3
      %p239 = scmp.lt.s32.totalorder %s234, 31
      %s240 = scalar_select %p239, %s234, 31
      %s241 = smul.addr %s238, 32
      %s242 = sadd.s32 %s240, %s241
      %s243 = smul.addr %s236, 128
      %s244 = sadd.s32 %s242, %s243
      %s245 = smul.addr %s244, 8
      %s246 = scalar_lea.vmem %s2, %s245
      %s247 = smul.u32 16, %s20
      %v248 = vld [vmem:[%s223] sm:$0xff]
      %v249 = vld [vmem:[%s223 + $0x8] sm:$0xff]
      %v250 = vld [vmem:[%s223 + $0x10] sm:$0xff]
      %v251 = vld [vmem:[%s223 + $0x18] sm:$0xff]
      %v252 = vld [vmem:[%s223 + $0x20] sm:$0xff]
      %v253 = vld [vmem:[%s223 + $0x28] sm:$0xff]
      %v254 = vld [vmem:[%s223 + $0x30] sm:$0xff]
      %v255 = vld [vmem:[%s223 + $0x38] sm:$0xff]
      %v256 = vld [vmem:[%s223 + $0x40] sm:$0xff]
      %v257 = vld [vmem:[%s223 + $0x48] sm:$0xff]
      %v258 = vld [vmem:[%s223 + $0x50] sm:$0xff]
      %v259 = vld [vmem:[%s223 + $0x58] sm:$0xff]
      %v260 = vld [vmem:[%s223 + $0x60] sm:$0xff]
      %v261 = vld [vmem:[%s223 + $0x68] sm:$0xff]
      %v262 = vld [vmem:[%s223 + $0x70] sm:$0xff]
      %v263 = vld [vmem:[%s223 + $0x78] sm:$0xff]
      %v264 = vld [vmem:[%s233] sm:$0xff]
      %v265 = vld [vmem:[%s233 + $0x8] sm:$0xff]
      %v266 = vld [vmem:[%s233 + $0x10] sm:$0xff]
      %v267 = vld [vmem:[%s233 + $0x18] sm:$0xff]
      %v268 = vld [vmem:[%s233 + $0x20] sm:$0xff]
      %v269 = vld [vmem:[%s233 + $0x28] sm:$0xff]
      %v270 = vld [vmem:[%s233 + $0x30] sm:$0xff]
      %v271 = vld [vmem:[%s233 + $0x38] sm:$0xff]
      %v272 = vld [vmem:[%s233 + $0x40] sm:$0xff]
      %v273 = vld [vmem:[%s233 + $0x48] sm:$0xff]
      %v274 = vld [vmem:[%s233 + $0x50] sm:$0xff]
      %v275 = vld [vmem:[%s233 + $0x58] sm:$0xff]
      %v276 = vld [vmem:[%s233 + $0x60] sm:$0xff]
      %v277 = vld [vmem:[%s233 + $0x68] sm:$0xff]
      %v278 = vld [vmem:[%s233 + $0x70] sm:$0xff]
      %v279 = vld [vmem:[%s233 + $0x78] sm:$0xff]
      %v280 = vld [vmem:[%s233 + $0x80] sm:$0xff]
      %v281 = vld [vmem:[%s233 + $0x88] sm:$0xff]
      %v282 = vld [vmem:[%s233 + $0x90] sm:$0xff]
      %v283 = vld [vmem:[%s233 + $0x98] sm:$0xff]
      %v284 = vld [vmem:[%s233 + $0xa0] sm:$0xff]
      %v285 = vld [vmem:[%s233 + $0xa8] sm:$0xff]
      %v286 = vld [vmem:[%s233 + $0xb0] sm:$0xff]
      %v287 = vld [vmem:[%s233 + $0xb8] sm:$0xff]
      %v288 = vld [vmem:[%s233 + $0xc0] sm:$0xff]
      %v289 = vld [vmem:[%s233 + $0xc8] sm:$0xff]
      %v290 = vld [vmem:[%s233 + $0xd0] sm:$0xff]
      %v291 = vld [vmem:[%s233 + $0xd8] sm:$0xff]
      %v292 = vld [vmem:[%s233 + $0xe0] sm:$0xff]
      %v293 = vld [vmem:[%s233 + $0xe8] sm:$0xff]
      %v294 = vld [vmem:[%s233 + $0xf0] sm:$0xff]
      %v295 = vld [vmem:[%s233 + $0xf8] sm:$0xff]
      %328 = vrot.lane.b32.xlu0 %v264, 120
      %v329 = vpop.permute.xlu0 %328
      %330 = vrot.lane.b32.xlu0 %v265, 120
      %v331 = vpop.permute.xlu0 %330
      %332 = vrot.lane.b32.xlu0 %v266, 120
      %v333 = vpop.permute.xlu0 %332
      %334 = vrot.lane.b32.xlu0 %v267, 120
      %v335 = vpop.permute.xlu0 %334
      %336 = vrot.lane.b32.xlu0 %v268, 120
      %v337 = vpop.permute.xlu0 %336
      %338 = vrot.lane.b32.xlu0 %v269, 120
      %v339 = vpop.permute.xlu0 %338
      %340 = vrot.lane.b32.xlu0 %v270, 120
      %v341 = vpop.permute.xlu0 %340
      %342 = vrot.lane.b32.xlu0 %v271, 120
      %v343 = vpop.permute.xlu0 %342
      %344 = vrot.lane.b32.xlu0 %v272, 120
      %v345 = vpop.permute.xlu0 %344
      %346 = vrot.lane.b32.xlu0 %v273, 120
      %v347 = vpop.permute.xlu0 %346
      %348 = vrot.lane.b32.xlu0 %v274, 120
      %v349 = vpop.permute.xlu0 %348
      %350 = vrot.lane.b32.xlu0 %v275, 120
      %v351 = vpop.permute.xlu0 %350
      %352 = vrot.lane.b32.xlu0 %v276, 120
      %v353 = vpop.permute.xlu0 %352
      %354 = vrot.lane.b32.xlu0 %v277, 120
      %v355 = vpop.permute.xlu0 %354
      %356 = vrot.lane.b32.xlu0 %v278, 120
      %v357 = vpop.permute.xlu0 %356
      %358 = vrot.lane.b32.xlu0 %v279, 120
      %v359 = vpop.permute.xlu0 %358
      %360 = vrot.lane.b32.xlu0 %v280, 120
      %v361 = vpop.permute.xlu0 %360
      %362 = vrot.lane.b32.xlu0 %v281, 120
      %v363 = vpop.permute.xlu0 %362
      %364 = vrot.lane.b32.xlu0 %v282, 120
      %v365 = vpop.permute.xlu0 %364
      %366 = vrot.lane.b32.xlu0 %v283, 120
      %v367 = vpop.permute.xlu0 %366
      %368 = vrot.lane.b32.xlu0 %v284, 120
      %v369 = vpop.permute.xlu0 %368
      %370 = vrot.lane.b32.xlu0 %v285, 120
      %v371 = vpop.permute.xlu0 %370
      %372 = vrot.lane.b32.xlu0 %v286, 120
      %v373 = vpop.permute.xlu0 %372
      %374 = vrot.lane.b32.xlu0 %v287, 120
      %v375 = vpop.permute.xlu0 %374
      %376 = vrot.lane.b32.xlu0 %v288, 120
      %v377 = vpop.permute.xlu0 %376
      %378 = vrot.lane.b32.xlu0 %v289, 120
      %v379 = vpop.permute.xlu0 %378
      %380 = vrot.lane.b32.xlu0 %v290, 120
      %v381 = vpop.permute.xlu0 %380
      %382 = vrot.lane.b32.xlu0 %v291, 120
      %v383 = vpop.permute.xlu0 %382
      %384 = vrot.lane.b32.xlu0 %v292, 120
      %v385 = vpop.permute.xlu0 %384
      %386 = vrot.lane.b32.xlu0 %v293, 120
      %v387 = vpop.permute.xlu0 %386
      %388 = vrot.lane.b32.xlu0 %v294, 120
      %v389 = vpop.permute.xlu0 %388
      %390 = vrot.lane.b32.xlu0 %v295, 120
      %v391 = vpop.permute.xlu0 %390
      %vm392 = vcmask 64512
      %v394 = vsel %vm392, %v248, 0
      %v397 = vsel %vm392, %v249, 0
      %v400 = vsel %vm392, %v250, 0
      %v403 = vsel %vm392, %v251, 0
      %v406 = vsel %vm392, %v252, 0
      %v409 = vsel %vm392, %v253, 0
      %v412 = vsel %vm392, %v254, 0
      %v415 = vsel %vm392, %v255, 0
      %v418 = vsel %vm392, %v256, 0
      %v421 = vsel %vm392, %v257, 0
      %v424 = vsel %vm392, %v258, 0
      %v427 = vsel %vm392, %v259, 0
      %v430 = vsel %vm392, %v260, 0
      %v433 = vsel %vm392, %v261, 0
      %v436 = vsel %vm392, %v262, 0
      %v439 = vsel %vm392, %v263, 0
      %v441 = vsel %vm392, %v329, 0
      %v443 = vsel %vm392, %v331, 0
      %v445 = vsel %vm392, %v333, 0
      %v447 = vsel %vm392, %v335, 0
      %v449 = vsel %vm392, %v337, 0
      %v451 = vsel %vm392, %v339, 0
      %v453 = vsel %vm392, %v341, 0
      %v455 = vsel %vm392, %v343, 0
      %v457 = vsel %vm392, %v345, 0
      %v459 = vsel %vm392, %v347, 0
      %v461 = vsel %vm392, %v349, 0
      %v463 = vsel %vm392, %v351, 0
      %v465 = vsel %vm392, %v353, 0
      %v467 = vsel %vm392, %v355, 0
      %v469 = vsel %vm392, %v357, 0
      %v471 = vsel %vm392, %v359, 0
      %v473 = vsel %vm392, %v361, 0
      %v475 = vsel %vm392, %v363, 0
      %v477 = vsel %vm392, %v365, 0
      %v479 = vsel %vm392, %v367, 0
      %v481 = vsel %vm392, %v369, 0
      %v483 = vsel %vm392, %v371, 0
      %v485 = vsel %vm392, %v373, 0
      %v487 = vsel %vm392, %v375, 0
      %v489 = vsel %vm392, %v377, 0
      %v491 = vsel %vm392, %v379, 0
      %v493 = vsel %vm392, %v381, 0
      %v495 = vsel %vm392, %v383, 0
      %v497 = vsel %vm392, %v385, 0
      %v499 = vsel %vm392, %v387, 0
      %v501 = vsel %vm392, %v389, 0
      %v503 = vsel %vm392, %v391, 0
      %505 = vmatpush.xpose.msra.mxu0 %v471
      %506 = vmatpush.xpose.msra.mxu0 %v469
      %507 = vmatpush.xpose.msra.mxu0 %v467
      %508 = vmatpush.xpose.msra.mxu0 %v465
      %509 = vmatpush.xpose.msra.mxu0 %v463
      %510 = vmatpush.xpose.msra.mxu0 %v461
      %511 = vmatpush.xpose.msra.mxu0 %v459
      %512 = vmatpush.xpose.msra.mxu0 %v457
      %513 = vmatpush.xpose.msra.mxu0 %v455
      %514 = vmatpush.xpose.msra.mxu0 %v453
      %515 = vmatpush.xpose.msra.mxu0 %v451
      %516 = vmatpush.xpose.msra.mxu0 %v449
      %517 = vmatpush.xpose.msra.mxu0 %v447
      %518 = vmatpush.xpose.msra.mxu0 %v445
      %519 = vmatpush.xpose.msra.mxu0 %v443
      %520 = vmatpush.xpose.msra.mxu0 %v441
      %521 = vmatmul.f32.gmra.mxu0 %v394
      %v522 = vpop.f32.mrf.mxu0
      %v523 = vadd.f32 0.0, %v522
      %524 = vmatmul.f32.gmra.mxu0 %v397
      %v525 = vpop.f32.mrf.mxu0
      %v526 = vadd.f32 0.0, %v525
      %527 = vmatmul.f32.gmra.mxu0 %v400
      %v528 = vpop.f32.mrf.mxu0
      %v529 = vadd.f32 0.0, %v528
      %530 = vmatmul.f32.gmra.mxu0 %v403
      %v531 = vpop.f32.mrf.mxu0
      %v532 = vadd.f32 0.0, %v531
      %533 = vmatmul.f32.gmra.mxu0 %v406
      %v534 = vpop.f32.mrf.mxu0
      %v535 = vadd.f32 0.0, %v534
      %536 = vmatmul.f32.gmra.mxu0 %v409
      %v537 = vpop.f32.mrf.mxu0
      %v538 = vadd.f32 0.0, %v537
      %539 = vmatmul.f32.gmra.mxu0 %v412
      %v540 = vpop.f32.mrf.mxu0
      %v541 = vadd.f32 0.0, %v540
      %542 = vmatmul.f32.gmra.mxu0 %v415
      %v543 = vpop.f32.mrf.mxu0
      %v544 = vadd.f32 0.0, %v543
      %545 = vmatmul.f32.gmra.mxu0 %v418
      %v546 = vpop.f32.mrf.mxu0
      %v547 = vadd.f32 0.0, %v546
      %548 = vmatmul.f32.gmra.mxu0 %v421
      %v549 = vpop.f32.mrf.mxu0
      %v550 = vadd.f32 0.0, %v549
      %551 = vmatmul.f32.gmra.mxu0 %v424
      %v552 = vpop.f32.mrf.mxu0
      %v553 = vadd.f32 0.0, %v552
      %554 = vmatmul.f32.gmra.mxu0 %v427
      %v555 = vpop.f32.mrf.mxu0
      %v556 = vadd.f32 0.0, %v555
      %557 = vmatmul.f32.gmra.mxu0 %v430
      %v558 = vpop.f32.mrf.mxu0
      %v559 = vadd.f32 0.0, %v558
      %560 = vmatmul.f32.gmra.mxu0 %v433
      %v561 = vpop.f32.mrf.mxu0
      %v562 = vadd.f32 0.0, %v561
      %563 = vmatmul.f32.gmra.mxu0 %v436
      %v564 = vpop.f32.mrf.mxu0
      %v565 = vadd.f32 0.0, %v564
      %566 = vmatmul.f32.gmra.mxu0 %v439
      %v567 = vpop.f32.mrf.mxu0
      %v568 = vadd.f32 0.0, %v567
      %569 = vdwg.mxu0
      %570 = vmatpush.xpose.msra.mxu0 %v503
      %571 = vmatpush.xpose.msra.mxu0 %v501
      %572 = vmatpush.xpose.msra.mxu0 %v499
      %573 = vmatpush.xpose.msra.mxu0 %v497
      %574 = vmatpush.xpose.msra.mxu0 %v495
      %575 = vmatpush.xpose.msra.mxu0 %v493
      %576 = vmatpush.xpose.msra.mxu0 %v491
      %577 = vmatpush.xpose.msra.mxu0 %v489
      %578 = vmatpush.xpose.msra.mxu0 %v487
      %579 = vmatpush.xpose.msra.mxu0 %v485
      %580 = vmatpush.xpose.msra.mxu0 %v483
      %581 = vmatpush.xpose.msra.mxu0 %v481
      %582 = vmatpush.xpose.msra.mxu0 %v479
      %583 = vmatpush.xpose.msra.mxu0 %v477
      %584 = vmatpush.xpose.msra.mxu0 %v475
      %585 = vmatpush.xpose.msra.mxu0 %v473
      %586 = vmatmul.f32.gmra.mxu0 %v394
      %v587 = vpop.f32.mrf.mxu0
      %v588 = vadd.f32 0.0, %v587
      %589 = vmatmul.f32.gmra.mxu0 %v397
      %v590 = vpop.f32.mrf.mxu0
      %v591 = vadd.f32 0.0, %v590
      %592 = vmatmul.f32.gmra.mxu0 %v400
      %v593 = vpop.f32.mrf.mxu0
      %v594 = vadd.f32 0.0, %v593
      %595 = vmatmul.f32.gmra.mxu0 %v403
      %v596 = vpop.f32.mrf.mxu0
      %v597 = vadd.f32 0.0, %v596
      %598 = vmatmul.f32.gmra.mxu0 %v406
      %v599 = vpop.f32.mrf.mxu0
      %v600 = vadd.f32 0.0, %v599
      %601 = vmatmul.f32.gmra.mxu0 %v409
      %v602 = vpop.f32.mrf.mxu0
      %v603 = vadd.f32 0.0, %v602
      %604 = vmatmul.f32.gmra.mxu0 %v412
      %v605 = vpop.f32.mrf.mxu0
      %v606 = vadd.f32 0.0, %v605
      %607 = vmatmul.f32.gmra.mxu0 %v415
      %v608 = vpop.f32.mrf.mxu0
      %v609 = vadd.f32 0.0, %v608
      %610 = vmatmul.f32.gmra.mxu0 %v418
      %v611 = vpop.f32.mrf.mxu0
      %v612 = vadd.f32 0.0, %v611
      %613 = vmatmul.f32.gmra.mxu0 %v421
      %v614 = vpop.f32.mrf.mxu0
      %v615 = vadd.f32 0.0, %v614
      %616 = vmatmul.f32.gmra.mxu0 %v424
      %v617 = vpop.f32.mrf.mxu0
      %v618 = vadd.f32 0.0, %v617
      %619 = vmatmul.f32.gmra.mxu0 %v427
      %v620 = vpop.f32.mrf.mxu0
      %v621 = vadd.f32 0.0, %v620
      %622 = vmatmul.f32.gmra.mxu0 %v430
      %v623 = vpop.f32.mrf.mxu0
      %v624 = vadd.f32 0.0, %v623
      %625 = vmatmul.f32.gmra.mxu0 %v433
      %v626 = vpop.f32.mrf.mxu0
      %v627 = vadd.f32 0.0, %v626
      %628 = vmatmul.f32.gmra.mxu0 %v436
      %v629 = vpop.f32.mrf.mxu0
      %v630 = vadd.f32 0.0, %v629
      %631 = vmatmul.f32.gmra.mxu0 %v439
      %v632 = vpop.f32.mrf.mxu0
      %v633 = vadd.f32 0.0, %v632
      %634 = vdwg.mxu0
      %v635 = vmul.f32 %v523, 0.35355338
      %v636 = vmul.f32 %v588, 0.35355338
      %v637 = vmul.f32 %v526, 0.35355338
      %v638 = vmul.f32 %v591, 0.35355338
      %v639 = vmul.f32 %v529, 0.35355338
      %v640 = vmul.f32 %v594, 0.35355338
      %v641 = vmul.f32 %v532, 0.35355338
      %v642 = vmul.f32 %v597, 0.35355338
      %v643 = vmul.f32 %v535, 0.35355338
      %v644 = vmul.f32 %v600, 0.35355338
      %v645 = vmul.f32 %v538, 0.35355338
      %v646 = vmul.f32 %v603, 0.35355338
      %v647 = vmul.f32 %v541, 0.35355338
      %v648 = vmul.f32 %v606, 0.35355338
      %v649 = vmul.f32 %v544, 0.35355338
      %v650 = vmul.f32 %v609, 0.35355338
      %v651 = vmul.f32 %v547, 0.35355338
      %v652 = vmul.f32 %v612, 0.35355338
      %v653 = vmul.f32 %v550, 0.35355338
      %v654 = vmul.f32 %v615, 0.35355338
      %v655 = vmul.f32 %v553, 0.35355338
      %v656 = vmul.f32 %v618, 0.35355338
      %v657 = vmul.f32 %v556, 0.35355338
      %v658 = vmul.f32 %v621, 0.35355338
      %v659 = vmul.f32 %v559, 0.35355338
      %v660 = vmul.f32 %v624, 0.35355338
      %v661 = vmul.f32 %v562, 0.35355338
      %v662 = vmul.f32 %v627, 0.35355338
      %v663 = vmul.f32 %v565, 0.35355338
      %v664 = vmul.f32 %v630, 0.35355338
      %v665 = vmul.f32 %v568, 0.35355338
      %v666 = vmul.f32 %v633, 0.35355338
      %v667 = vmax.f32 %v635, %v636
      %668 = vmax.xlane.f32.xlu0 %v667
      %v669 = vpop.xlane.xlu0 %668
      %v670 = vmax.f32 %v637, %v638
      %671 = vmax.xlane.f32.xlu0 %v670
      %v672 = vpop.xlane.xlu0 %671
      %v673 = vmax.f32 %v639, %v640
      %674 = vmax.xlane.f32.xlu0 %v673
      %v675 = vpop.xlane.xlu0 %674
      %v676 = vmax.f32 %v641, %v642
      %677 = vmax.xlane.f32.xlu0 %v676
      %v678 = vpop.xlane.xlu0 %677
      %v679 = vmax.f32 %v643, %v644
      %680 = vmax.xlane.f32.xlu0 %v679
      %v681 = vpop.xlane.xlu0 %680
      %v682 = vmax.f32 %v645, %v646
      %683 = vmax.xlane.f32.xlu0 %v682
      %v684 = vpop.xlane.xlu0 %683
      %v685 = vmax.f32 %v647, %v648
      %686 = vmax.xlane.f32.xlu0 %v685
      %v687 = vpop.xlane.xlu0 %686
      %v688 = vmax.f32 %v649, %v650
      %689 = vmax.xlane.f32.xlu0 %v688
      %v690 = vpop.xlane.xlu0 %689
      %v691 = vmax.f32 %v651, %v652
      %692 = vmax.xlane.f32.xlu0 %v691
      %v693 = vpop.xlane.xlu0 %692
      %v694 = vmax.f32 %v653, %v654
      %695 = vmax.xlane.f32.xlu0 %v694
      %v696 = vpop.xlane.xlu0 %695
      %v697 = vmax.f32 %v655, %v656
      %698 = vmax.xlane.f32.xlu0 %v697
      %v699 = vpop.xlane.xlu0 %698
      %v700 = vmax.f32 %v657, %v658
      %701 = vmax.xlane.f32.xlu0 %v700
      %v702 = vpop.xlane.xlu0 %701
      %v703 = vmax.f32 %v659, %v660
      %704 = vmax.xlane.f32.xlu0 %v703
      %v705 = vpop.xlane.xlu0 %704
      %v706 = vmax.f32 %v661, %v662
      %707 = vmax.xlane.f32.xlu0 %v706
      %v708 = vpop.xlane.xlu0 %707
      %v709 = vmax.f32 %v663, %v664
      %710 = vmax.xlane.f32.xlu0 %v709
      %v711 = vpop.xlane.xlu0 %710
      %v712 = vmax.f32 %v665, %v666
      %713 = vmax.xlane.f32.xlu0 %v712
      %v714 = vpop.xlane.xlu0 %713
      %v715 = vsub.f32 %v635, %v669
      %v716 = vsub.f32 %v636, %v669
      %v717 = vsub.f32 %v637, %v672
      %v718 = vsub.f32 %v638, %v672
      %v719 = vsub.f32 %v639, %v675
      %v720 = vsub.f32 %v640, %v675
      %v721 = vsub.f32 %v641, %v678
      %v722 = vsub.f32 %v642, %v678
      %v723 = vsub.f32 %v643, %v681
      %v724 = vsub.f32 %v644, %v681
      %v725 = vsub.f32 %v645, %v684
      %v726 = vsub.f32 %v646, %v684
      %v727 = vsub.f32 %v647, %v687
      %v728 = vsub.f32 %v648, %v687
      %v729 = vsub.f32 %v649, %v690
      %v730 = vsub.f32 %v650, %v690
      %v731 = vsub.f32 %v651, %v693
      %v732 = vsub.f32 %v652, %v693
      %v733 = vsub.f32 %v653, %v696
      %v734 = vsub.f32 %v654, %v696
      %v735 = vsub.f32 %v655, %v699
      %v736 = vsub.f32 %v656, %v699
      %v737 = vsub.f32 %v657, %v702
      %v738 = vsub.f32 %v658, %v702
      %v739 = vsub.f32 %v659, %v705
      %v740 = vsub.f32 %v660, %v705
      %v741 = vsub.f32 %v661, %v708
      %v742 = vsub.f32 %v662, %v708
      %v743 = vsub.f32 %v663, %v711
      %v744 = vsub.f32 %v664, %v711
      %v745 = vsub.f32 %v665, %v714
      %v746 = vsub.f32 %v666, %v714
      %v747 = vmul.f32 %v715, 1.442695
      %v748 = vpow.pop %v747
      %v749 = vmul.f32 %v716, 1.442695
      %v750 = vpow.pop %v749
      %v751 = vmul.f32 %v717, 1.442695
      %v752 = vpow.pop %v751
      %v753 = vmul.f32 %v718, 1.442695
      %v754 = vpow.pop %v753
      %v755 = vmul.f32 %v719, 1.442695
      %v756 = vpow.pop %v755
      %v757 = vmul.f32 %v720, 1.442695
      %v758 = vpow.pop %v757
      %v759 = vmul.f32 %v721, 1.442695
      %v760 = vpow.pop %v759
      %v761 = vmul.f32 %v722, 1.442695
      %v762 = vpow.pop %v761
      %v763 = vmul.f32 %v723, 1.442695
      %v764 = vpow.pop %v763
      %v765 = vmul.f32 %v724, 1.442695
      %v766 = vpow.pop %v765
      %v767 = vmul.f32 %v725, 1.442695
      %v768 = vpow.pop %v767
      %v769 = vmul.f32 %v726, 1.442695
      %v770 = vpow.pop %v769
      %v771 = vmul.f32 %v727, 1.442695
      %v772 = vpow.pop %v771
      %v773 = vmul.f32 %v728, 1.442695
      %v774 = vpow.pop %v773
      %v775 = vmul.f32 %v729, 1.442695
      %v776 = vpow.pop %v775
      %v777 = vmul.f32 %v730, 1.442695
      %v778 = vpow.pop %v777
      %v779 = vmul.f32 %v731, 1.442695
      %v780 = vpow.pop %v779
      %v781 = vmul.f32 %v732, 1.442695
      %v782 = vpow.pop %v781
      %v783 = vmul.f32 %v733, 1.442695
      %v784 = vpow.pop %v783
      %v785 = vmul.f32 %v734, 1.442695
      %v786 = vpow.pop %v785
      %v787 = vmul.f32 %v735, 1.442695
      %v788 = vpow.pop %v787
      %v789 = vmul.f32 %v736, 1.442695
      %v790 = vpow.pop %v789
      %v791 = vmul.f32 %v737, 1.442695
      %v792 = vpow.pop %v791
      %v793 = vmul.f32 %v738, 1.442695
      %v794 = vpow.pop %v793
      %v795 = vmul.f32 %v739, 1.442695
      %v796 = vpow.pop %v795
      %v797 = vmul.f32 %v740, 1.442695
      %v798 = vpow.pop %v797
      %v799 = vmul.f32 %v741, 1.442695
      %v800 = vpow.pop %v799
      %v801 = vmul.f32 %v742, 1.442695
      %v802 = vpow.pop %v801
      %v803 = vmul.f32 %v743, 1.442695
      %v804 = vpow.pop %v803
      %v805 = vmul.f32 %v744, 1.442695
      %v806 = vpow.pop %v805
      %v807 = vmul.f32 %v745, 1.442695
      %v808 = vpow.pop %v807
      %v809 = vmul.f32 %v746, 1.442695
      %v810 = vpow.pop %v809
      %v811 = vadd.f32 %v748, %v750
      %812 = vadd.xlane.f32.xlu0 %v811
      %v813 = vpop.xlane.xlu0 %812
      %v814 = vadd.f32 %v752, %v754
      %815 = vadd.xlane.f32.xlu0 %v814
      %v816 = vpop.xlane.xlu0 %815
      %v817 = vadd.f32 %v756, %v758
      %818 = vadd.xlane.f32.xlu0 %v817
      %v819 = vpop.xlane.xlu0 %818
      %v820 = vadd.f32 %v760, %v762
      %821 = vadd.xlane.f32.xlu0 %v820
      %v822 = vpop.xlane.xlu0 %821
      %v823 = vadd.f32 %v764, %v766
      %824 = vadd.xlane.f32.xlu0 %v823
      %v825 = vpop.xlane.xlu0 %824
      %v826 = vadd.f32 %v768, %v770
      %827 = vadd.xlane.f32.xlu0 %v826
      %v828 = vpop.xlane.xlu0 %827
      %v829 = vadd.f32 %v772, %v774
      %830 = vadd.xlane.f32.xlu0 %v829
      %v831 = vpop.xlane.xlu0 %830
      %v832 = vadd.f32 %v776, %v778
      %833 = vadd.xlane.f32.xlu0 %v832
      %v834 = vpop.xlane.xlu0 %833
      %v835 = vadd.f32 %v780, %v782
      %836 = vadd.xlane.f32.xlu0 %v835
      %v837 = vpop.xlane.xlu0 %836
      %v838 = vadd.f32 %v784, %v786
      %839 = vadd.xlane.f32.xlu0 %v838
      %v840 = vpop.xlane.xlu0 %839
      %v841 = vadd.f32 %v788, %v790
      %842 = vadd.xlane.f32.xlu0 %v841
      %v843 = vpop.xlane.xlu0 %842
      %v844 = vadd.f32 %v792, %v794
      %845 = vadd.xlane.f32.xlu0 %v844
      %v846 = vpop.xlane.xlu0 %845
      %v847 = vadd.f32 %v796, %v798
      %848 = vadd.xlane.f32.xlu0 %v847
      %v849 = vpop.xlane.xlu0 %848
      %v850 = vadd.f32 %v800, %v802
      %851 = vadd.xlane.f32.xlu0 %v850
      %v852 = vpop.xlane.xlu0 %851
      %v853 = vadd.f32 %v804, %v806
      %854 = vadd.xlane.f32.xlu0 %v853
      %v855 = vpop.xlane.xlu0 %854
      %v856 = vadd.f32 %v808, %v810
      %857 = vadd.xlane.f32.xlu0 %v856
      %v858 = vpop.xlane.xlu0 %857
      %v859 = vrcp.pop %v813
      %v860 = vmul.f32 %v813, %v859
      %v861 = vsub.f32 1.0, %v860
      %v862 = vmul.f32 %v859, %v861
      %v863 = vadd.f32 %v859, %v862
      %vm864 = vweird.f32 %v813
      %vm865 = vweird.f32 %v859
      %vm866 = vmor %vm864, %vm865
      %v867 = vsel %vm866, %v859, %v863
      %v868 = vand.u32 2147483647, %v813
      %vm869 = vcmp.eq.f32.partialorder %v868, 8.507059e+37
      %v870 = vand.u32 %v813, 2147483648
      %v871 = vor.u32 1.1754944e-38, %v870
      %v872 = vsel %vm869, %v871, %v867
      %v873 = vmul.f32 %v748, %v872
      %v874 = vmul.f32 %v750, %v872
      %v875 = vrcp.pop %v816
      %v876 = vmul.f32 %v816, %v875
      %v877 = vsub.f32 1.0, %v876
      %v878 = vmul.f32 %v875, %v877
      %v879 = vadd.f32 %v875, %v878
      %vm880 = vweird.f32 %v816
      %vm881 = vweird.f32 %v875
      %vm882 = vmor %vm880, %vm881
      %v883 = vsel %vm882, %v875, %v879
      %v884 = vand.u32 2147483647, %v816
      %vm885 = vcmp.eq.f32.partialorder %v884, 8.507059e+37
      %v886 = vand.u32 %v816, 2147483648
      %v887 = vor.u32 1.1754944e-38, %v886
      %v888 = vsel %vm885, %v887, %v883
      %v889 = vmul.f32 %v752, %v888
      %v890 = vmul.f32 %v754, %v888
      %v891 = vrcp.pop %v819
      %v892 = vmul.f32 %v819, %v891
      %v893 = vsub.f32 1.0, %v892
      %v894 = vmul.f32 %v891, %v893
      %v895 = vadd.f32 %v891, %v894
      %vm896 = vweird.f32 %v819
      %vm897 = vweird.f32 %v891
      %vm898 = vmor %vm896, %vm897
      %v899 = vsel %vm898, %v891, %v895
      %v900 = vand.u32 2147483647, %v819
      %vm901 = vcmp.eq.f32.partialorder %v900, 8.507059e+37
      %v902 = vand.u32 %v819, 2147483648
      %v903 = vor.u32 1.1754944e-38, %v902
      %v904 = vsel %vm901, %v903, %v899
      %v905 = vmul.f32 %v756, %v904
      %v906 = vmul.f32 %v758, %v904
      %v907 = vrcp.pop %v822
      %v908 = vmul.f32 %v822, %v907
      %v909 = vsub.f32 1.0, %v908
      %v910 = vmul.f32 %v907, %v909
      %v911 = vadd.f32 %v907, %v910
      %vm912 = vweird.f32 %v822
      %vm913 = vweird.f32 %v907
      %vm914 = vmor %vm912, %vm913
      %v915 = vsel %vm914, %v907, %v911
      %v916 = vand.u32 2147483647, %v822
      %vm917 = vcmp.eq.f32.partialorder %v916, 8.507059e+37
      %v918 = vand.u32 %v822, 2147483648
      %v919 = vor.u32 1.1754944e-38, %v918
      %v920 = vsel %vm917, %v919, %v915
      %v921 = vmul.f32 %v760, %v920
      %v922 = vmul.f32 %v762, %v920
      %v923 = vrcp.pop %v825
      %v924 = vmul.f32 %v825, %v923
      %v925 = vsub.f32 1.0, %v924
      %v926 = vmul.f32 %v923, %v925
      %v927 = vadd.f32 %v923, %v926
      %vm928 = vweird.f32 %v825
      %vm929 = vweird.f32 %v923
      %vm930 = vmor %vm928, %vm929
      %v931 = vsel %vm930, %v923, %v927
      %v932 = vand.u32 2147483647, %v825
      %vm933 = vcmp.eq.f32.partialorder %v932, 8.507059e+37
      %v934 = vand.u32 %v825, 2147483648
      %v935 = vor.u32 1.1754944e-38, %v934
      %v936 = vsel %vm933, %v935, %v931
      %v937 = vmul.f32 %v764, %v936
      %v938 = vmul.f32 %v766, %v936
      %v939 = vrcp.pop %v828
      %v940 = vmul.f32 %v828, %v939
      %v941 = vsub.f32 1.0, %v940
      %v942 = vmul.f32 %v939, %v941
      %v943 = vadd.f32 %v939, %v942
      %vm944 = vweird.f32 %v828
      %vm945 = vweird.f32 %v939
      %vm946 = vmor %vm944, %vm945
      %v947 = vsel %vm946, %v939, %v943
      %v948 = vand.u32 2147483647, %v828
      %vm949 = vcmp.eq.f32.partialorder %v948, 8.507059e+37
      %v950 = vand.u32 %v828, 2147483648
      %v951 = vor.u32 1.1754944e-38, %v950
      %v952 = vsel %vm949, %v951, %v947
      %v953 = vmul.f32 %v768, %v952
      %v954 = vmul.f32 %v770, %v952
      %v955 = vrcp.pop %v831
      %v956 = vmul.f32 %v831, %v955
      %v957 = vsub.f32 1.0, %v956
      %v958 = vmul.f32 %v955, %v957
      %v959 = vadd.f32 %v955, %v958
      %vm960 = vweird.f32 %v831
      %vm961 = vweird.f32 %v955
      %vm962 = vmor %vm960, %vm961
      %v963 = vsel %vm962, %v955, %v959
      %v964 = vand.u32 2147483647, %v831
      %vm965 = vcmp.eq.f32.partialorder %v964, 8.507059e+37
      %v966 = vand.u32 %v831, 2147483648
      %v967 = vor.u32 1.1754944e-38, %v966
      %v968 = vsel %vm965, %v967, %v963
      %v969 = vmul.f32 %v772, %v968
      %v970 = vmul.f32 %v774, %v968
      %v971 = vrcp.pop %v834
      %v972 = vmul.f32 %v834, %v971
      %v973 = vsub.f32 1.0, %v972
      %v974 = vmul.f32 %v971, %v973
      %v975 = vadd.f32 %v971, %v974
      %vm976 = vweird.f32 %v834
      %vm977 = vweird.f32 %v971
      %vm978 = vmor %vm976, %vm977
      %v979 = vsel %vm978, %v971, %v975
      %v980 = vand.u32 2147483647, %v834
      %vm981 = vcmp.eq.f32.partialorder %v980, 8.507059e+37
      %v982 = vand.u32 %v834, 2147483648
      %v983 = vor.u32 1.1754944e-38, %v982
      %v984 = vsel %vm981, %v983, %v979
      %v985 = vmul.f32 %v776, %v984
      %v986 = vmul.f32 %v778, %v984
      %v987 = vrcp.pop %v837
      %v988 = vmul.f32 %v837, %v987
      %v989 = vsub.f32 1.0, %v988
      %v990 = vmul.f32 %v987, %v989
      %v991 = vadd.f32 %v987, %v990
      %vm992 = vweird.f32 %v837
      %vm993 = vweird.f32 %v987
      %vm994 = vmor %vm992, %vm993
      %v995 = vsel %vm994, %v987, %v991
      %v996 = vand.u32 2147483647, %v837
      %vm997 = vcmp.eq.f32.partialorder %v996, 8.507059e+37
      %v998 = vand.u32 %v837, 2147483648
      %v999 = vor.u32 1.1754944e-38, %v998
      %v1000 = vsel %vm997, %v999, %v995
      %v1001 = vmul.f32 %v780, %v1000
      %v1002 = vmul.f32 %v782, %v1000
      %v1003 = vrcp.pop %v840
      %v1004 = vmul.f32 %v840, %v1003
      %v1005 = vsub.f32 1.0, %v1004
      %v1006 = vmul.f32 %v1003, %v1005
      %v1007 = vadd.f32 %v1003, %v1006
      %vm1008 = vweird.f32 %v840
      %vm1009 = vweird.f32 %v1003
      %vm1010 = vmor %vm1008, %vm1009
      %v1011 = vsel %vm1010, %v1003, %v1007
      %v1012 = vand.u32 2147483647, %v840
      %vm1013 = vcmp.eq.f32.partialorder %v1012, 8.507059e+37
      %v1014 = vand.u32 %v840, 2147483648
      %v1015 = vor.u32 1.1754944e-38, %v1014
      %v1016 = vsel %vm1013, %v1015, %v1011
      %v1017 = vmul.f32 %v784, %v1016
      %v1018 = vmul.f32 %v786, %v1016
      %v1019 = vrcp.pop %v843
      %v1020 = vmul.f32 %v843, %v1019
      %v1021 = vsub.f32 1.0, %v1020
      %v1022 = vmul.f32 %v1019, %v1021
      %v1023 = vadd.f32 %v1019, %v1022
      %vm1024 = vweird.f32 %v843
      %vm1025 = vweird.f32 %v1019
      %vm1026 = vmor %vm1024, %vm1025
      %v1027 = vsel %vm1026, %v1019, %v1023
      %v1028 = vand.u32 2147483647, %v843
      %vm1029 = vcmp.eq.f32.partialorder %v1028, 8.507059e+37
      %v1030 = vand.u32 %v843, 2147483648
      %v1031 = vor.u32 1.1754944e-38, %v1030
      %v1032 = vsel %vm1029, %v1031, %v1027
      %v1033 = vmul.f32 %v788, %v1032
      %v1034 = vmul.f32 %v790, %v1032
      %v1035 = vrcp.pop %v846
      %v1036 = vmul.f32 %v846, %v1035
      %v1037 = vsub.f32 1.0, %v1036
      %v1038 = vmul.f32 %v1035, %v1037
      %v1039 = vadd.f32 %v1035, %v1038
      %vm1040 = vweird.f32 %v846
      %vm1041 = vweird.f32 %v1035
      %vm1042 = vmor %vm1040, %vm1041
      %v1043 = vsel %vm1042, %v1035, %v1039
      %v1044 = vand.u32 2147483647, %v846
      %vm1045 = vcmp.eq.f32.partialorder %v1044, 8.507059e+37
      %v1046 = vand.u32 %v846, 2147483648
      %v1047 = vor.u32 1.1754944e-38, %v1046
      %v1048 = vsel %vm1045, %v1047, %v1043
      %v1049 = vmul.f32 %v792, %v1048
      %v1050 = vmul.f32 %v794, %v1048
      %v1051 = vrcp.pop %v849
      %v1052 = vmul.f32 %v849, %v1051
      %v1053 = vsub.f32 1.0, %v1052
      %v1054 = vmul.f32 %v1051, %v1053
      %v1055 = vadd.f32 %v1051, %v1054
      %vm1056 = vweird.f32 %v849
      %vm1057 = vweird.f32 %v1051
      %vm1058 = vmor %vm1056, %vm1057
      %v1059 = vsel %vm1058, %v1051, %v1055
      %v1060 = vand.u32 2147483647, %v849
      %vm1061 = vcmp.eq.f32.partialorder %v1060, 8.507059e+37
      %v1062 = vand.u32 %v849, 2147483648
      %v1063 = vor.u32 1.1754944e-38, %v1062
      %v1064 = vsel %vm1061, %v1063, %v1059
      %v1065 = vmul.f32 %v796, %v1064
      %v1066 = vmul.f32 %v798, %v1064
      %v1067 = vrcp.pop %v852
      %v1068 = vmul.f32 %v852, %v1067
      %v1069 = vsub.f32 1.0, %v1068
      %v1070 = vmul.f32 %v1067, %v1069
      %v1071 = vadd.f32 %v1067, %v1070
      %vm1072 = vweird.f32 %v852
      %vm1073 = vweird.f32 %v1067
      %vm1074 = vmor %vm1072, %vm1073
      %v1075 = vsel %vm1074, %v1067, %v1071
      %v1076 = vand.u32 2147483647, %v852
      %vm1077 = vcmp.eq.f32.partialorder %v1076, 8.507059e+37
      %v1078 = vand.u32 %v852, 2147483648
      %v1079 = vor.u32 1.1754944e-38, %v1078
      %v1080 = vsel %vm1077, %v1079, %v1075
      %v1081 = vmul.f32 %v800, %v1080
      %v1082 = vmul.f32 %v802, %v1080
      %v1083 = vrcp.pop %v855
      %v1084 = vmul.f32 %v855, %v1083
      %v1085 = vsub.f32 1.0, %v1084
      %v1086 = vmul.f32 %v1083, %v1085
      %v1087 = vadd.f32 %v1083, %v1086
      %vm1088 = vweird.f32 %v855
      %vm1089 = vweird.f32 %v1083
      %vm1090 = vmor %vm1088, %vm1089
      %v1091 = vsel %vm1090, %v1083, %v1087
      %v1092 = vand.u32 2147483647, %v855
      %vm1093 = vcmp.eq.f32.partialorder %v1092, 8.507059e+37
      %v1094 = vand.u32 %v855, 2147483648
      %v1095 = vor.u32 1.1754944e-38, %v1094
      %v1096 = vsel %vm1093, %v1095, %v1091
      %v1097 = vmul.f32 %v804, %v1096
      %v1098 = vmul.f32 %v806, %v1096
      %v1099 = vrcp.pop %v858
      %v1100 = vmul.f32 %v858, %v1099
      %v1101 = vsub.f32 1.0, %v1100
      %v1102 = vmul.f32 %v1099, %v1101
      %v1103 = vadd.f32 %v1099, %v1102
      %vm1104 = vweird.f32 %v858
      %vm1105 = vweird.f32 %v1099
      %vm1106 = vmor %vm1104, %vm1105
      %v1107 = vsel %vm1106, %v1099, %v1103
      %v1108 = vand.u32 2147483647, %v858
      %vm1109 = vcmp.eq.f32.partialorder %v1108, 8.507059e+37
      %v1110 = vand.u32 %v858, 2147483648
      %v1111 = vor.u32 1.1754944e-38, %v1110
      %v1112 = vsel %vm1109, %v1111, %v1107
      %v1113 = vmul.f32 %v808, %v1112
      %v1114 = vmul.f32 %v810, %v1112
      %1115 = vrot.lane.b32.xlu0 %v264, 112
      %v1116 = vpop.permute.xlu0 %1115
      %1117 = vrot.lane.b32.xlu0 %v265, 112
      %v1118 = vpop.permute.xlu0 %1117
      %1119 = vrot.lane.b32.xlu0 %v266, 112
      %v1120 = vpop.permute.xlu0 %1119
      %1121 = vrot.lane.b32.xlu0 %v267, 112
      %v1122 = vpop.permute.xlu0 %1121
      %1123 = vrot.lane.b32.xlu0 %v268, 112
      %v1124 = vpop.permute.xlu0 %1123
      %1125 = vrot.lane.b32.xlu0 %v269, 112
      %v1126 = vpop.permute.xlu0 %1125
      %1127 = vrot.lane.b32.xlu0 %v270, 112
      %v1128 = vpop.permute.xlu0 %1127
      %1129 = vrot.lane.b32.xlu0 %v271, 112
      %v1130 = vpop.permute.xlu0 %1129
      %1131 = vrot.lane.b32.xlu0 %v272, 112
      %v1132 = vpop.permute.xlu0 %1131
      %1133 = vrot.lane.b32.xlu0 %v273, 112
      %v1134 = vpop.permute.xlu0 %1133
      %1135 = vrot.lane.b32.xlu0 %v274, 112
      %v1136 = vpop.permute.xlu0 %1135
      %1137 = vrot.lane.b32.xlu0 %v275, 112
      %v1138 = vpop.permute.xlu0 %1137
      %1139 = vrot.lane.b32.xlu0 %v276, 112
      %v1140 = vpop.permute.xlu0 %1139
      %1141 = vrot.lane.b32.xlu0 %v277, 112
      %v1142 = vpop.permute.xlu0 %1141
      %1143 = vrot.lane.b32.xlu0 %v278, 112
      %v1144 = vpop.permute.xlu0 %1143
      %1145 = vrot.lane.b32.xlu0 %v279, 112
      %v1146 = vpop.permute.xlu0 %1145
      %1147 = vrot.lane.b32.xlu0 %v280, 112
      %v1148 = vpop.permute.xlu0 %1147
      %1149 = vrot.lane.b32.xlu0 %v281, 112
      %v1150 = vpop.permute.xlu0 %1149
      %1151 = vrot.lane.b32.xlu0 %v282, 112
      %v1152 = vpop.permute.xlu0 %1151
      %1153 = vrot.lane.b32.xlu0 %v283, 112
      %v1154 = vpop.permute.xlu0 %1153
      %1155 = vrot.lane.b32.xlu0 %v284, 112
      %v1156 = vpop.permute.xlu0 %1155
      %1157 = vrot.lane.b32.xlu0 %v285, 112
      %v1158 = vpop.permute.xlu0 %1157
      %1159 = vrot.lane.b32.xlu0 %v286, 112
      %v1160 = vpop.permute.xlu0 %1159
      %1161 = vrot.lane.b32.xlu0 %v287, 112
      %v1162 = vpop.permute.xlu0 %1161
      %1163 = vrot.lane.b32.xlu0 %v288, 112
      %v1164 = vpop.permute.xlu0 %1163
      %1165 = vrot.lane.b32.xlu0 %v289, 112
      %v1166 = vpop.permute.xlu0 %1165
      %1167 = vrot.lane.b32.xlu0 %v290, 112
      %v1168 = vpop.permute.xlu0 %1167
      %1169 = vrot.lane.b32.xlu0 %v291, 112
      %v1170 = vpop.permute.xlu0 %1169
      %1171 = vrot.lane.b32.xlu0 %v292, 112
      %v1172 = vpop.permute.xlu0 %1171
      %1173 = vrot.lane.b32.xlu0 %v293, 112
      %v1174 = vpop.permute.xlu0 %1173
      %1175 = vrot.lane.b32.xlu0 %v294, 112
      %v1176 = vpop.permute.xlu0 %1175
      %1177 = vrot.lane.b32.xlu0 %v295, 112
      %v1178 = vpop.permute.xlu0 %1177
      %1211 = vmatpush.msra.mxu0 %v1146
      %1212 = vmatpush.msra.mxu0 %v1144
      %1213 = vmatpush.msra.mxu0 %v1142
      %1214 = vmatpush.msra.mxu0 %v1140
      %1215 = vmatpush.msra.mxu0 %v1138
      %1216 = vmatpush.msra.mxu0 %v1136
      %1217 = vmatpush.msra.mxu0 %v1134
      %1218 = vmatpush.msra.mxu0 %v1132
      %1219 = vmatpush.msra.mxu0 %v1130
      %1220 = vmatpush.msra.mxu0 %v1128
      %1221 = vmatpush.msra.mxu0 %v1126
      %1222 = vmatpush.msra.mxu0 %v1124
      %1223 = vmatpush.msra.mxu0 %v1122
      %1224 = vmatpush.msra.mxu0 %v1120
      %1225 = vmatpush.msra.mxu0 %v1118
      %1226 = vmatpush.msra.mxu0 %v1116
      %1227 = vmatmul.f32.gmra.mxu0 %v873
      %v1228 = vpop.f32.mrf.mxu0
      %v1229 = vadd.f32 0.0, %v1228
      %1230 = vmatmul.f32.gmra.mxu0 %v889
      %v1231 = vpop.f32.mrf.mxu0
      %v1232 = vadd.f32 0.0, %v1231
      %1233 = vmatmul.f32.gmra.mxu0 %v905
      %v1234 = vpop.f32.mrf.mxu0
      %v1235 = vadd.f32 0.0, %v1234
      %1236 = vmatmul.f32.gmra.mxu0 %v921
      %v1237 = vpop.f32.mrf.mxu0
      %v1238 = vadd.f32 0.0, %v1237
      %1239 = vmatmul.f32.gmra.mxu0 %v937
      %v1240 = vpop.f32.mrf.mxu0
      %v1241 = vadd.f32 0.0, %v1240
      %1242 = vmatmul.f32.gmra.mxu0 %v953
      %v1243 = vpop.f32.mrf.mxu0
      %v1244 = vadd.f32 0.0, %v1243
      %1245 = vmatmul.f32.gmra.mxu0 %v969
      %v1246 = vpop.f32.mrf.mxu0
      %v1247 = vadd.f32 0.0, %v1246
      %1248 = vmatmul.f32.gmra.mxu0 %v985
      %v1249 = vpop.f32.mrf.mxu0
      %v1250 = vadd.f32 0.0, %v1249
      %1251 = vmatmul.f32.gmra.mxu0 %v1001
      %v1252 = vpop.f32.mrf.mxu0
      %v1253 = vadd.f32 0.0, %v1252
      %1254 = vmatmul.f32.gmra.mxu0 %v1017
      %v1255 = vpop.f32.mrf.mxu0
      %v1256 = vadd.f32 0.0, %v1255
      %1257 = vmatmul.f32.gmra.mxu0 %v1033
      %v1258 = vpop.f32.mrf.mxu0
      %v1259 = vadd.f32 0.0, %v1258
      %1260 = vmatmul.f32.gmra.mxu0 %v1049
      %v1261 = vpop.f32.mrf.mxu0
      %v1262 = vadd.f32 0.0, %v1261
      %1263 = vmatmul.f32.gmra.mxu0 %v1065
      %v1264 = vpop.f32.mrf.mxu0
      %v1265 = vadd.f32 0.0, %v1264
      %1266 = vmatmul.f32.gmra.mxu0 %v1081
      %v1267 = vpop.f32.mrf.mxu0
      %v1268 = vadd.f32 0.0, %v1267
      %1269 = vmatmul.f32.gmra.mxu0 %v1097
      %v1270 = vpop.f32.mrf.mxu0
      %v1271 = vadd.f32 0.0, %v1270
      %1272 = vmatmul.f32.gmra.mxu0 %v1113
      %v1273 = vpop.f32.mrf.mxu0
      %v1274 = vadd.f32 0.0, %v1273
      %1275 = vdwg.mxu0
      %1276 = vmatpush.msra.mxu0 %v1178
      %1277 = vmatpush.msra.mxu0 %v1176
      %1278 = vmatpush.msra.mxu0 %v1174
      %1279 = vmatpush.msra.mxu0 %v1172
      %1280 = vmatpush.msra.mxu0 %v1170
      %1281 = vmatpush.msra.mxu0 %v1168
      %1282 = vmatpush.msra.mxu0 %v1166
      %1283 = vmatpush.msra.mxu0 %v1164
      %1284 = vmatpush.msra.mxu0 %v1162
      %1285 = vmatpush.msra.mxu0 %v1160
      %1286 = vmatpush.msra.mxu0 %v1158
      %1287 = vmatpush.msra.mxu0 %v1156
      %1288 = vmatpush.msra.mxu0 %v1154
      %1289 = vmatpush.msra.mxu0 %v1152
      %1290 = vmatpush.msra.mxu0 %v1150
      %1291 = vmatpush.msra.mxu0 %v1148
      %1292 = vmatmul.f32.gmra.mxu0 %v874
      %v1293 = vpop.f32.mrf.mxu0
      %v1294 = vadd.f32 %v1229, %v1293
      %1295 = vmatmul.f32.gmra.mxu0 %v890
      %v1296 = vpop.f32.mrf.mxu0
      %v1297 = vadd.f32 %v1232, %v1296
      %1298 = vmatmul.f32.gmra.mxu0 %v906
      %v1299 = vpop.f32.mrf.mxu0
      %v1300 = vadd.f32 %v1235, %v1299
      %1301 = vmatmul.f32.gmra.mxu0 %v922
      %v1302 = vpop.f32.mrf.mxu0
      %v1303 = vadd.f32 %v1238, %v1302
      %1304 = vmatmul.f32.gmra.mxu0 %v938
      %v1305 = vpop.f32.mrf.mxu0
      %v1306 = vadd.f32 %v1241, %v1305
      %1307 = vmatmul.f32.gmra.mxu0 %v954
      %v1308 = vpop.f32.mrf.mxu0
      %v1309 = vadd.f32 %v1244, %v1308
      %1310 = vmatmul.f32.gmra.mxu0 %v970
      %v1311 = vpop.f32.mrf.mxu0
      %v1312 = vadd.f32 %v1247, %v1311
      %1313 = vmatmul.f32.gmra.mxu0 %v986
      %v1314 = vpop.f32.mrf.mxu0
      %v1315 = vadd.f32 %v1250, %v1314
      %1316 = vmatmul.f32.gmra.mxu0 %v1002
      %v1317 = vpop.f32.mrf.mxu0
      %v1318 = vadd.f32 %v1253, %v1317
      %1319 = vmatmul.f32.gmra.mxu0 %v1018
      %v1320 = vpop.f32.mrf.mxu0
      %v1321 = vadd.f32 %v1256, %v1320
      %1322 = vmatmul.f32.gmra.mxu0 %v1034
      %v1323 = vpop.f32.mrf.mxu0
      %v1324 = vadd.f32 %v1259, %v1323
      %1325 = vmatmul.f32.gmra.mxu0 %v1050
      %v1326 = vpop.f32.mrf.mxu0
      %v1327 = vadd.f32 %v1262, %v1326
      %1328 = vmatmul.f32.gmra.mxu0 %v1066
      %v1329 = vpop.f32.mrf.mxu0
      %v1330 = vadd.f32 %v1265, %v1329
      %1331 = vmatmul.f32.gmra.mxu0 %v1082
      %v1332 = vpop.f32.mrf.mxu0
      %v1333 = vadd.f32 %v1268, %v1332
      %1334 = vmatmul.f32.gmra.mxu0 %v1098
      %v1335 = vpop.f32.mrf.mxu0
      %v1336 = vadd.f32 %v1271, %v1335
      %1337 = vmatmul.f32.gmra.mxu0 %v1114
      %v1338 = vpop.f32.mrf.mxu0
      %v1339 = vadd.f32 %v1274, %v1338
      %1340 = vdwg.mxu0
      %1341 = vst.msk [vmem:[%s246] sm:$0xff] %vm392, %v1294
      %1342 = vst.msk [vmem:[%s246 + $0x8] sm:$0xff] %vm392, %v1297
      %1343 = vst.msk [vmem:[%s246 + $0x10] sm:$0xff] %vm392, %v1300
      %1344 = vst.msk [vmem:[%s246 + $0x18] sm:$0xff] %vm392, %v1303
      %1345 = vst.msk [vmem:[%s246 + $0x20] sm:$0xff] %vm392, %v1306
      %1346 = vst.msk [vmem:[%s246 + $0x28] sm:$0xff] %vm392, %v1309
      %1347 = vst.msk [vmem:[%s246 + $0x30] sm:$0xff] %vm392, %v1312
      %1348 = vst.msk [vmem:[%s246 + $0x38] sm:$0xff] %vm392, %v1315
      %1349 = vst.msk [vmem:[%s246 + $0x40] sm:$0xff] %vm392, %v1318
      %1350 = vst.msk [vmem:[%s246 + $0x48] sm:$0xff] %vm392, %v1321
      %1351 = vst.msk [vmem:[%s246 + $0x50] sm:$0xff] %vm392, %v1324
      %1352 = vst.msk [vmem:[%s246 + $0x58] sm:$0xff] %vm392, %v1327
      %1353 = vst.msk [vmem:[%s246 + $0x60] sm:$0xff] %vm392, %v1330
      %1354 = vst.msk [vmem:[%s246 + $0x68] sm:$0xff] %vm392, %v1333
      %1355 = vst.msk [vmem:[%s246 + $0x70] sm:$0xff] %vm392, %v1336
      %1356 = vst.msk [vmem:[%s246 + $0x78] sm:$0xff] %vm392, %v1339
      %s1357 = smul.u32 16, %s20
      %p1358 = scmp.lt.s32.totalorder %s18, 1
      %s1359 = scalar_select %p1358, %s18, 1
      %p1360 = scmp.lt.s32.totalorder %s19, 3
      %s1361 = scalar_select %p1360, %s19, 3
      %p1362 = scmp.lt.s32.totalorder %s1357, 31
      %s1363 = scalar_select %p1362, %s1357, 31
      %s1364 = smul.addr %s1361, 32
      %s1365 = sadd.s32 %s1363, %s1364
      %s1366 = smul.addr %s1359, 128
      %s1367 = sadd.s32 %s1365, %s1366
      %s1368 = smul.addr %s1367, 8
      %s1369 = scalar_lea.vmem %s2, %s1368
      // Predicated region
      $region29: #{self_attention.4} parent=27 // pred_check
        %p1370 = pneg %p112
      $region30: #{self_attention.4} parent=27 // pred_check_branch
        %1372 = sbr.rel (%p1370) target = $region32
      $region31: #{self_attention.4} parent=27 // pred_region
        %s1373 = smul.u32 16, %s20
      $region32: #{self_attention.4} parent=27 // pred_fallthru
        _
    $region28: #{self_attention.4} parent=5 // pred_fallthru
      _
    %p1374 = scmp.le.s32.totalorder 2, %s8
    // Predicated region
    $region33: #{self_attention.4} parent=5 // pred_check
      %p1375 = pneg %p1374
    $region34: #{self_attention.4} parent=5 // pred_check_branch
      %1377 = sbr.rel (%p1375) target = $region36
    $region35: #{self_attention.4} parent=5 // pred_region
      %s1378 = ssub.s32 %s8, 2
      // Predicated region
      $region37: #{self_attention.4} parent=35 // pred_check
        %p1379 = pneg %p118
      $region38: #{self_attention.4} parent=35 // pred_check_branch
        %1381 = sbr.rel (%p1379) target = $region40
      $region39: #{self_attention.4} parent=35 // pred_region
        %s1382 = smul.u32 16, %s23
        %p1383 = scmp.lt.s32.totalorder %s21, 1
        %s1384 = scalar_select %p1383, %s21, 1
        %p1385 = scmp.lt.s32.totalorder %s22, 3
        %s1386 = scalar_select %p1385, %s22, 3
        %p1387 = scmp.lt.s32.totalorder %s1382, 31
        %s1388 = scalar_select %p1387, %s1382, 31
        %s1389 = smul.addr %s1386, 32
        %s1390 = sadd.s32 %s1388, %s1389
        %s1391 = smul.addr %s1384, 128
        %s1392 = sadd.s32 %s1390, %s1391
        %s1393 = smul.addr %s1392, 8
        %s1394 = scalar_lea.vmem %s2, %s1393
      $region40: #{self_attention.4} parent=35 // pred_fallthru
        _
    $region36: #{self_attention.4} parent=5 // pred_fallthru
      _
  $region6: #{self_attention.4} parent=0 // loop_footer
    %s12 = sadd.s32 1, %s8
  $region7: #{self_attention.4} parent=0 // loop_footer_branch
    %7 = sbr.rel target = $region3
  $region8: #{self_attention.4} parent=0 // loop_exit
    _

// kernel: self_attention.3
$region0: #{self_attention.3}
  #allocation0 [shape = 'u32[]', space=smem, size = 0x4, offset = 0x4, fixed_abs, tag = 'smem constant byte address 0x4 - core index']
  #allocation1 [shape = 'u32[72,128]{1,0:T(1,128)}', space=vmem, size = 0x9000, scoped, tag = 'internal scratch']
  %s0 = inlined_call_operand.hbm [shape: f32[512,32], index: 0, kind: input, shape index: {}]
  %s1 = inlined_call_operand.vmem [shape: f32[1,32], index: 1, kind: input, shape index: {}]
  %s2 = inlined_call_operand.vmem [shape: f32[1,32], index: 2, kind: input, shape index: {}]
  %s3 = inlined_call_operand.hbm [shape: f32[32,96], index: 3, kind: input, shape index: {}]
  %s4 = inlined_call_operand.vmem [shape: f32[512,96], index: 4, kind: output, shape index: {}]
  %s5 = sld [smem:[#allocation0]]
  $region34: #{self_attention.3} parent=0
    _
  %s7 = ssub.s32 1, %s5
  %s8 = scalar_select 0, %s7, %s5
  $region1: #{self_attention.3} parent=0
    #allocation2 [shape = 'u8[262144]{0}', space=vmem, size = 0x40000, scoped, tag = 'input window, operand 0, single buffered']
    #allocation3 [shape = 's32[1]{0}', space=sflag, size = 0x4, scoped, tag = 'scoped memory for self_attention.3']
    #allocation4 [shape = 'u8[16384]{0}', space=vmem, size = 0x4000, scoped, tag = 'input window, operand 3, single buffered']
    #allocation5 [shape = 's32[1]{0}', space=sflag, size = 0x4, scoped, tag = 'scoped memory for self_attention.3']
    %9 = vsyncpa [#allocation3], 0
    %10 = vsyncpa [#allocation5], 0
    // Predicated region
    $region2: #{self_attention.3} parent=1 // pred_check
      _
    $region3: #{self_attention.3} parent=1 // pred_check_branch
      %12 = sbr.rel (0) target = $region5
    $region4: #{self_attention.3} parent=1 // pred_region
      %14 = vsyncadd [#allocation3], 0
      %s15 = sshll.u32 %s0, 4
      %s16 = int_to_ptr.hbm [resolvable:$true] %s15
      %s17 = sshll.u32 [#allocation2], 4
      %s18 = int_to_ptr.vmem [resolvable:$true] %s17
      %23 = dma.hbm_to_vmem [thread:$0]  %s16, 8192, %s18, [#allocation3], 128, 128, 8
    $region5: #{self_attention.3} parent=1 // pred_fallthru
      _
    // Predicated region
    $region6: #{self_attention.3} parent=1 // pred_check
      _
    $region7: #{self_attention.3} parent=1 // pred_check_branch
      %25 = sbr.rel (0) target = $region9
    $region8: #{self_attention.3} parent=1 // pred_region
      _
    $region9: #{self_attention.3} parent=1 // pred_fallthru
      _
    // Predicated region
    $region10: #{self_attention.3} parent=1 // pred_check
      _
    $region11: #{self_attention.3} parent=1 // pred_check_branch
      %27 = sbr.rel (0) target = $region13
    $region12: #{self_attention.3} parent=1 // pred_region
      _
    $region13: #{self_attention.3} parent=1 // pred_fallthru
      _
    // Predicated region
    $region14: #{self_attention.3} parent=1 // pred_check
      _
    $region15: #{self_attention.3} parent=1 // pred_check_branch
      %29 = sbr.rel (0) target = $region17
    $region16: #{self_attention.3} parent=1 // pred_region
      %31 = vsyncadd [#allocation5], 0
      %s32 = sshll.u32 %s3, 4
      %s33 = int_to_ptr.hbm [resolvable:$true] %s32
      %s34 = sshll.u32 [#allocation4], 4
      %s35 = int_to_ptr.vmem [resolvable:$true] %s34
      %40 = dma.hbm_to_vmem [thread:$0]  %s33, 512, %s35, [#allocation5], 128, 128, 8
    $region17: #{self_attention.3} parent=1 // pred_fallthru
      _
    // Predicated region
    $region18: #{self_attention.3} parent=1 // pred_check
      _
    $region19: #{self_attention.3} parent=1 // pred_check_branch
      %42 = sbr.rel (0) target = $region21
    $region20: #{self_attention.3} parent=1 // pred_region
      %44 = dma.done [#allocation3], 8192
    $region21: #{self_attention.3} parent=1 // pred_fallthru
      _
    // Predicated region
    $region22: #{self_attention.3} parent=1 // pred_check
      _
    $region23: #{self_attention.3} parent=1 // pred_check_branch
      %46 = sbr.rel (0) target = $region25
    $region24: #{self_attention.3} parent=1 // pred_region
      %48 = dma.done [#allocation5], 512
    $region25: #{self_attention.3} parent=1 // pred_fallthru
      _
    %v49 = vld [vmem:[#allocation2] sm:$0xff]
    %v50 = vld [vmem:[#allocation2 + $0x8] sm:$0xff]
    %v51 = vld [vmem:[#allocation2 + $0x10] sm:$0xff]
    %v52 = vld [vmem:[#allocation2 + $0x18] sm:$0xff]
    %v53 = vld [vmem:[#allocation2 + $0x20] sm:$0xff]
    %v54 = vld [vmem:[#allocation2 + $0x28] sm:$0xff]
    %v55 = vld [vmem:[#allocation2 + $0x30] sm:$0xff]
    %v56 = vld [vmem:[#allocation2 + $0x38] sm:$0xff]
    %v57 = vld [vmem:[#allocation2 + $0x40] sm:$0xff]
    %v58 = vld [vmem:[#allocation2 + $0x48] sm:$0xff]
    %v59 = vld [vmem:[#allocation2 + $0x50] sm:$0xff]
    %v60 = vld [vmem:[#allocation2 + $0x58] sm:$0xff]
    %v61 = vld [vmem:[#allocation2 + $0x60] sm:$0xff]
    %v62 = vld [vmem:[#allocation2 + $0x68] sm:$0xff]
    %v63 = vld [vmem:[#allocation2 + $0x70] sm:$0xff]
    %v64 = vld [vmem:[#allocation2 + $0x78] sm:$0xff]
    %v65 = vld [vmem:[#allocation2 + $0x80] sm:$0xff]
    %v66 = vld [vmem:[#allocation2 + $0x88] sm:$0xff]
    %v67 = vld [vmem:[#allocation2 + $0x90] sm:$0xff]
    %v68 = vld [vmem:[#allocation2 + $0x98] sm:$0xff]
    %v69 = vld [vmem:[#allocation2 + $0xa0] sm:$0xff]
    %v70 = vld [vmem:[#allocation2 + $0xa8] sm:$0xff]
    %v71 = vld [vmem:[#allocation2 + $0xb0] sm:$0xff]
    %v72 = vld [vmem:[#allocation2 + $0xb8] sm:$0xff]
    %v73 = vld [vmem:[#allocation2 + $0xc0] sm:$0xff]
    %v74 = vld [vmem:[#allocation2 + $0xc8] sm:$0xff]
    %v75 = vld [vmem:[#allocation2 + $0xd0] sm:$0xff]
    %v76 = vld [vmem:[#allocation2 + $0xd8] sm:$0xff]
    %v77 = vld [vmem:[#allocation2 + $0xe0] sm:$0xff]
    %v78 = vld [vmem:[#allocation2 + $0xe8] sm:$0xff]
    %v79 = vld [vmem:[#allocation2 + $0xf0] sm:$0xff]
    %v80 = vld [vmem:[#allocation2 + $0xf8] sm:$0xff]
    %v81 = vld [vmem:[#allocation2 + $0x100] sm:$0xff]
    %v82 = vld [vmem:[#allocation2 + $0x108] sm:$0xff]
    %v83 = vld [vmem:[#allocation2 + $0x110] sm:$0xff]
    %v84 = vld [vmem:[#allocation2 + $0x118] sm:$0xff]
    %v85 = vld [vmem:[#allocation2 + $0x120] sm:$0xff]
    %v86 = vld [vmem:[#allocation2 + $0x128] sm:$0xff]
    %v87 = vld [vmem:[#allocation2 + $0x130] sm:$0xff]
    %v88 = vld [vmem:[#allocation2 + $0x138] sm:$0xff]
    %v89 = vld [vmem:[#allocation2 + $0x140] sm:$0xff]
    %v90 = vld [vmem:[#allocation2 + $0x148] sm:$0xff]
    %v91 = vld [vmem:[#allocation2 + $0x150] sm:$0xff]
    %v92 = vld [vmem:[#allocation2 + $0x158] sm:$0xff]
    %v93 = vld [vmem:[#allocation2 + $0x160] sm:$0xff]
    %v94 = vld [vmem:[#allocation2 + $0x168] sm:$0xff]
    %v95 = vld [vmem:[#allocation2 + $0x170] sm:$0xff]
    %v96 = vld [vmem:[#allocation2 + $0x178] sm:$0xff]
    %v97 = vld [vmem:[#allocation2 + $0x180] sm:$0xff]
    %v98 = vld [vmem:[#allocation2 + $0x188] sm:$0xff]
    %v99 = vld [vmem:[#allocation2 + $0x190] sm:$0xff]
    %v100 = vld [vmem:[#allocation2 + $0x198] sm:$0xff]
    %v101 = vld [vmem:[#allocation2 + $0x1a0] sm:$0xff]
    %v102 = vld [vmem:[#allocation2 + $0x1a8] sm:$0xff]
    %v103 = vld [vmem:[#allocation2 + $0x1b0] sm:$0xff]
    %v104 = vld [vmem:[#allocation2 + $0x1b8] sm:$0xff]
    %v105 = vld [vmem:[#allocation2 + $0x1c0] sm:$0xff]
    %v106 = vld [vmem:[#allocation2 + $0x1c8] sm:$0xff]
    %v107 = vld [vmem:[#allocation2 + $0x1d0] sm:$0xff]
    %v108 = vld [vmem:[#allocation2 + $0x1d8] sm:$0xff]
    %v109 = vld [vmem:[#allocation2 + $0x1e0] sm:$0xff]
    %v110 = vld [vmem:[#allocation2 + $0x1e8] sm:$0xff]
    %v111 = vld [vmem:[#allocation2 + $0x1f0] sm:$0xff]
    %v112 = vld [vmem:[#allocation2 + $0x1f8] sm:$0xff]
    %vm113 = vcmask 261120
    %v114 = vsel %vm113, %v49, 0.0
    %v115 = vsel %vm113, %v50, 0.0
    %v116 = vadd.f32 %v114, %v115
    %v117 = vsel %vm113, %v51, 0.0
    %v118 = vadd.f32 %v116, %v117
    %v119 = vsel %vm113, %v52, 0.0
    %v120 = vadd.f32 %v118, %v119
    %v121 = vsel %vm113, %v53, 0.0
    %v122 = vadd.f32 %v120, %v121
    %v123 = vsel %vm113, %v54, 0.0
    %v124 = vadd.f32 %v122, %v123
    %v125 = vsel %vm113, %v55, 0.0
    %v126 = vadd.f32 %v124, %v125
    %v127 = vsel %vm113, %v56, 0.0
    %v128 = vadd.f32 %v126, %v127
    %v129 = vsel %vm113, %v57, 0.0
    %v130 = vadd.f32 %v128, %v129
    %v131 = vsel %vm113, %v58, 0.0
    %v132 = vadd.f32 %v130, %v131
    %v133 = vsel %vm113, %v59, 0.0
    %v134 = vadd.f32 %v132, %v133
    %v135 = vsel %vm113, %v60, 0.0
    %v136 = vadd.f32 %v134, %v135
    %v137 = vsel %vm113, %v61, 0.0
    %v138 = vadd.f32 %v136, %v137
    %v139 = vsel %vm113, %v62, 0.0
    %v140 = vadd.f32 %v138, %v139
    %v141 = vsel %vm113, %v63, 0.0
    %v142 = vadd.f32 %v140, %v141
    %v143 = vsel %vm113, %v64, 0.0
    %v144 = vadd.f32 %v142, %v143
    %v145 = vsel %vm113, %v65, 0.0
    %v146 = vadd.f32 %v144, %v145
    %v147 = vsel %vm113, %v66, 0.0
    %v148 = vadd.f32 %v146, %v147
    %v149 = vsel %vm113, %v67, 0.0
    %v150 = vadd.f32 %v148, %v149
    %v151 = vsel %vm113, %v68, 0.0
    %v152 = vadd.f32 %v150, %v151
    %v153 = vsel %vm113, %v69, 0.0
    %v154 = vadd.f32 %v152, %v153
    %v155 = vsel %vm113, %v70, 0.0
    %v156 = vadd.f32 %v154, %v155
    %v157 = vsel %vm113, %v71, 0.0
    %v158 = vadd.f32 %v156, %v157
    %v159 = vsel %vm113, %v72, 0.0
    %v160 = vadd.f32 %v158, %v159
    %v161 = vsel %vm113, %v73, 0.0
    %v162 = vadd.f32 %v160, %v161
    %v163 = vsel %vm113, %v74, 0.0
    %v164 = vadd.f32 %v162, %v163
    %v165 = vsel %vm113, %v75, 0.0
    %v166 = vadd.f32 %v164, %v165
    %v167 = vsel %vm113, %v76, 0.0
    %v168 = vadd.f32 %v166, %v167
    %v169 = vsel %vm113, %v77, 0.0
    %v170 = vadd.f32 %v168, %v169
    %v171 = vsel %vm113, %v78, 0.0
    %v172 = vadd.f32 %v170, %v171
    %v173 = vsel %vm113, %v79, 0.0
    %v174 = vadd.f32 %v172, %v173
    %v175 = vsel %vm113, %v80, 0.0
    %v176 = vadd.f32 %v174, %v175
    %v177 = vsel %vm113, %v81, 0.0
    %v178 = vadd.f32 %v176, %v177
    %v179 = vsel %vm113, %v82, 0.0
    %v180 = vadd.f32 %v178, %v179
    %v181 = vsel %vm113, %v83, 0.0
    %v182 = vadd.f32 %v180, %v181
    %v183 = vsel %vm113, %v84, 0.0
    %v184 = vadd.f32 %v182, %v183
    %v185 = vsel %vm113, %v85, 0.0
    %v186 = vadd.f32 %v184, %v185
    %v187 = vsel %vm113, %v86, 0.0
    %v188 = vadd.f32 %v186, %v187
    %v189 = vsel %vm113, %v87, 0.0
    %v190 = vadd.f32 %v188, %v189
    %v191 = vsel %vm113, %v88, 0.0
    %v192 = vadd.f32 %v190, %v191
    %v193 = vsel %vm113, %v89, 0.0
    %v194 = vadd.f32 %v192, %v193
    %v195 = vsel %vm113, %v90, 0.0
    %v196 = vadd.f32 %v194, %v195
    %v197 = vsel %vm113, %v91, 0.0
    %v198 = vadd.f32 %v196, %v197
    %v199 = vsel %vm113, %v92, 0.0
    %v200 = vadd.f32 %v198, %v199
    %v201 = vsel %vm113, %v93, 0.0
    %v202 = vadd.f32 %v200, %v201
    %v203 = vsel %vm113, %v94, 0.0
    %v204 = vadd.f32 %v202, %v203
    %v205 = vsel %vm113, %v95, 0.0
    %v206 = vadd.f32 %v204, %v205
    %v207 = vsel %vm113, %v96, 0.0
    %v208 = vadd.f32 %v206, %v207
    %v209 = vsel %vm113, %v97, 0.0
    %v210 = vadd.f32 %v208, %v209
    %v211 = vsel %vm113, %v98, 0.0
    %v212 = vadd.f32 %v210, %v211
    %v213 = vsel %vm113, %v99, 0.0
    %v214 = vadd.f32 %v212, %v213
    %v215 = vsel %vm113, %v100, 0.0
    %v216 = vadd.f32 %v214, %v215
    %v217 = vsel %vm113, %v101, 0.0
    %v218 = vadd.f32 %v216, %v217
    %v219 = vsel %vm113, %v102, 0.0
    %v220 = vadd.f32 %v218, %v219
    %v221 = vsel %vm113, %v103, 0.0
    %v222 = vadd.f32 %v220, %v221
    %v223 = vsel %vm113, %v104, 0.0
    %v224 = vadd.f32 %v222, %v223
    %v225 = vsel %vm113, %v105, 0.0
    %v226 = vadd.f32 %v224, %v225
    %v227 = vsel %vm113, %v106, 0.0
    %v228 = vadd.f32 %v226, %v227
    %v229 = vsel %vm113, %v107, 0.0
    %v230 = vadd.f32 %v228, %v229
    %v231 = vsel %vm113, %v108, 0.0
    %v232 = vadd.f32 %v230, %v231
    %v233 = vsel %vm113, %v109, 0.0
    %v234 = vadd.f32 %v232, %v233
    %v235 = vsel %vm113, %v110, 0.0
    %v236 = vadd.f32 %v234, %v235
    %v237 = vsel %vm113, %v111, 0.0
    %v238 = vadd.f32 %v236, %v237
    %v239 = vsel %vm113, %v112, 0.0
    %v240 = vadd.f32 %v238, %v239
    %v241 = vrot.slane %v240, 4
    %v242 = vadd.f32 %v240, %v241
    %v243 = vrot.slane %v242, 2
    %v244 = vadd.f32 %v242, %v243
    %v245 = vrot.slane %v244, 1
    %v246 = vadd.f32 %v244, %v245
    %v247 = vmul.f32 %v49, %v49
    %v248 = vmul.f32 %v50, %v50
    %v249 = vmul.f32 %v51, %v51
    %v250 = vmul.f32 %v52, %v52
    %v251 = vmul.f32 %v53, %v53
    %v252 = vmul.f32 %v54, %v54
    %v253 = vmul.f32 %v55, %v55
    %v254 = vmul.f32 %v56, %v56
    %v255 = vmul.f32 %v57, %v57
    %v256 = vmul.f32 %v58, %v58
    %v257 = vmul.f32 %v59, %v59
    %v258 = vmul.f32 %v60, %v60
    %v259 = vmul.f32 %v61, %v61
    %v260 = vmul.f32 %v62, %v62
    %v261 = vmul.f32 %v63, %v63
    %v262 = vmul.f32 %v64, %v64
    %v263 = vmul.f32 %v65, %v65
    %v264 = vmul.f32 %v66, %v66
    %v265 = vmul.f32 %v67, %v67
    %v266 = vmul.f32 %v68, %v68
    %v267 = vmul.f32 %v69, %v69
    %v268 = vmul.f32 %v70, %v70
    %v269 = vmul.f32 %v71, %v71
    %v270 = vmul.f32 %v72, %v72
    %v271 = vmul.f32 %v73, %v73
    %v272 = vmul.f32 %v74, %v74
    %v273 = vmul.f32 %v75, %v75
    %v274 = vmul.f32 %v76, %v76
    %v275 = vmul.f32 %v77, %v77
    %v276 = vmul.f32 %v78, %v78
    %v277 = vmul.f32 %v79, %v79
    %v278 = vmul.f32 %v80, %v80
    %v279 = vmul.f32 %v81, %v81
    %v280 = vmul.f32 %v82, %v82
    %v281 = vmul.f32 %v83, %v83
    %v282 = vmul.f32 %v84, %v84
    %v283 = vmul.f32 %v85, %v85
    %v284 = vmul.f32 %v86, %v86
    %v285 = vmul.f32 %v87, %v87
    %v286 = vmul.f32 %v88, %v88
    %v287 = vmul.f32 %v89, %v89
    %v288 = vmul.f32 %v90, %v90
    %v289 = vmul.f32 %v91, %v91
    %v290 = vmul.f32 %v92, %v92
    %v291 = vmul.f32 %v93, %v93
    %v292 = vmul.f32 %v94, %v94
    %v293 = vmul.f32 %v95, %v95
    %v294 = vmul.f32 %v96, %v96
    %v295 = vmul.f32 %v97, %v97
    %v296 = vmul.f32 %v98, %v98
    %v297 = vmul.f32 %v99, %v99
    %v298 = vmul.f32 %v100, %v100
    %v299 = vmul.f32 %v101, %v101
    %v300 = vmul.f32 %v102, %v102
    %v301 = vmul.f32 %v103, %v103
    %v302 = vmul.f32 %v104, %v104
    %v303 = vmul.f32 %v105, %v105
    %v304 = vmul.f32 %v106, %v106
    %v305 = vmul.f32 %v107, %v107
    %v306 = vmul.f32 %v108, %v108
    %v307 = vmul.f32 %v109, %v109
    %v308 = vmul.f32 %v110, %v110
    %v309 = vmul.f32 %v111, %v111
    %v310 = vmul.f32 %v112, %v112
    %v311 = vsel %vm113, %v247, 0.0
    %v312 = vsel %vm113, %v248, 0.0
    %v313 = vadd.f32 %v311, %v312
    %v314 = vsel %vm113, %v249, 0.0
    %v315 = vadd.f32 %v313, %v314
    %v316 = vsel %vm113, %v250, 0.0
    %v317 = vadd.f32 %v315, %v316
    %v318 = vsel %vm113, %v251, 0.0
    %v319 = vadd.f32 %v317, %v318
    %v320 = vsel %vm113, %v252, 0.0
    %v321 = vadd.f32 %v319, %v320
    %v322 = vsel %vm113, %v253, 0.0
    %v323 = vadd.f32 %v321, %v322
    %v324 = vsel %vm113, %v254, 0.0
    %v325 = vadd.f32 %v323, %v324
    %v326 = vsel %vm113, %v255, 0.0
    %v327 = vadd.f32 %v325, %v326
    %v328 = vsel %vm113, %v256, 0.0
    %v329 = vadd.f32 %v327, %v328
    %v330 = vsel %vm113, %v257, 0.0
    %v331 = vadd.f32 %v329, %v330
    %v332 = vsel %vm113, %v258, 0.0
    %v333 = vadd.f32 %v331, %v332
    %v334 = vsel %vm113, %v259, 0.0
    %v335 = vadd.f32 %v333, %v334
    %v336 = vsel %vm113, %v260, 0.0
    %v337 = vadd.f32 %v335, %v336
    %v338 = vsel %vm113, %v261, 0.0
    %v339 = vadd.f32 %v337, %v338
    %v340 = vsel %vm113, %v262, 0.0
    %v341 = vadd.f32 %v339, %v340
    %v342 = vsel %vm113, %v263, 0.0
    %v343 = vadd.f32 %v341, %v342
    %v344 = vsel %vm113, %v264, 0.0
    %v345 = vadd.f32 %v343, %v344
    %v346 = vsel %vm113, %v265, 0.0
    %v347 = vadd.f32 %v345, %v346
    %v348 = vsel %vm113, %v266, 0.0
    %v349 = vadd.f32 %v347, %v348
    %v350 = vsel %vm113, %v267, 0.0
    %v351 = vadd.f32 %v349, %v350
    %v352 = vsel %vm113, %v268, 0.0
    %v353 = vadd.f32 %v351, %v352
    %v354 = vsel %vm113, %v269, 0.0
    %v355 = vadd.f32 %v353, %v354
    %v356 = vsel %vm113, %v270, 0.0
    %v357 = vadd.f32 %v355, %v356
    %v358 = vsel %vm113, %v271, 0.0
    %v359 = vadd.f32 %v357, %v358
    %v360 = vsel %vm113, %v272, 0.0
    %v361 = vadd.f32 %v359, %v360
    %v362 = vsel %vm113, %v273, 0.0
    %v363 = vadd.f32 %v361, %v362
    %v364 = vsel %vm113, %v274, 0.0
    %v365 = vadd.f32 %v363, %v364
    %v366 = vsel %vm113, %v275, 0.0
    %v367 = vadd.f32 %v365, %v366
    %v368 = vsel %vm113, %v276, 0.0
    %v369 = vadd.f32 %v367, %v368
    %v370 = vsel %vm113, %v277, 0.0
    %v371 = vadd.f32 %v369, %v370
    %v372 = vsel %vm113, %v278, 0.0
    %v373 = vadd.f32 %v371, %v372
    %v374 = vsel %vm113, %v279, 0.0
    %v375 = vadd.f32 %v373, %v374
    %v376 = vsel %vm113, %v280, 0.0
    %v377 = vadd.f32 %v375, %v376
    %v378 = vsel %vm113, %v281, 0.0
    %v379 = vadd.f32 %v377, %v378
    %v380 = vsel %vm113, %v282, 0.0
    %v381 = vadd.f32 %v379, %v380
    %v382 = vsel %vm113, %v283, 0.0
    %v383 = vadd.f32 %v381, %v382
    %v384 = vsel %vm113, %v284, 0.0
    %v385 = vadd.f32 %v383, %v384
    %v386 = vsel %vm113, %v285, 0.0
    %v387 = vadd.f32 %v385, %v386
    %v388 = vsel %vm113, %v286, 0.0
    %v389 = vadd.f32 %v387, %v388
    %v390 = vsel %vm113, %v287, 0.0
    %v391 = vadd.f32 %v389, %v390
    %v392 = vsel %vm113, %v288, 0.0
    %v393 = vadd.f32 %v391, %v392
    %v394 = vsel %vm113, %v289, 0.0
    %v395 = vadd.f32 %v393, %v394
    %v396 = vsel %vm113, %v290, 0.0
    %v397 = vadd.f32 %v395, %v396
    %v398 = vsel %vm113, %v291, 0.0
    %v399 = vadd.f32 %v397, %v398
    %v400 = vsel %vm113, %v292, 0.0
    %v401 = vadd.f32 %v399, %v400
    %v402 = vsel %vm113, %v293, 0.0
    %v403 = vadd.f32 %v401, %v402
    %v404 = vsel %vm113, %v294, 0.0
    %v405 = vadd.f32 %v403, %v404
    %v406 = vsel %vm113, %v295, 0.0
    %v407 = vadd.f32 %v405, %v406
    %v408 = vsel %vm113, %v296, 0.0
    %v409 = vadd.f32 %v407, %v408
    %v410 = vsel %vm113, %v297, 0.0
    %v411 = vadd.f32 %v409, %v410
    %v412 = vsel %vm113, %v298, 0.0
    %v413 = vadd.f32 %v411, %v412
    %v414 = vsel %vm113, %v299, 0.0
    %v415 = vadd.f32 %v413, %v414
    %v416 = vsel %vm113, %v300, 0.0
    %v417 = vadd.f32 %v415, %v416
    %v418 = vsel %vm113, %v301, 0.0
    %v419 = vadd.f32 %v417, %v418
    %v420 = vsel %vm113, %v302, 0.0
    %v421 = vadd.f32 %v419, %v420
    %v422 = vsel %vm113, %v303, 0.0
    %v423 = vadd.f32 %v421, %v422
    %v424 = vsel %vm113, %v304, 0.0
    %v425 = vadd.f32 %v423, %v424
    %v426 = vsel %vm113, %v305, 0.0
    %v427 = vadd.f32 %v425, %v426
    %v428 = vsel %vm113, %v306, 0.0
    %v429 = vadd.f32 %v427, %v428
    %v430 = vsel %vm113, %v307, 0.0
    %v431 = vadd.f32 %v429, %v430
    %v432 = vsel %vm113, %v308, 0.0
    %v433 = vadd.f32 %v431, %v432
    %v434 = vsel %vm113, %v309, 0.0
    %v435 = vadd.f32 %v433, %v434
    %v436 = vsel %vm113, %v310, 0.0
    %v437 = vadd.f32 %v435, %v436
    %v438 = vrot.slane %v437, 4
    %v439 = vadd.f32 %v437, %v438
    %v440 = vrot.slane %v439, 2
    %v441 = vadd.f32 %v439, %v440
    %v442 = vrot.slane %v441, 1
    %v443 = vadd.f32 %v441, %v442
    %v444 = vmul.f32 %v246, 0.001953125
    %v445 = vmul.f32 %v443, 0.001953125
    %v446 = vmul.f32 %v444, %v444
    %v447 = vsub.f32 %v445, %v446
    %v448 = vld [vmem:[%s1] sm:$0x1]
    %v449 = vadd.f32 %v447, 1e-05
    %v450 = vrsqrt.pop %v449
    %v451 = vmul.f32 %v450, %v449
    %v452 = vmul.f32 %v451, %v450
    %v453 = vmul.f32 0.5, %v452
    %v454 = vsub.f32 1.5, %v453
    %v455 = vmul.f32 %v450, %v454
    %vm456 = vweird.f32 %v449
    %vm457 = vweird.f32 %v450
    %vm458 = vmor %vm456, %vm457
    %v459 = vsel %vm458, %v450, %v455
    %v460 = vmul.f32 %v448, %v459
    %v461 = vld [vmem:[%s2] sm:$0x1]
    %v462 = vmul.f32 %v444, %v460
    %v463 = vsub.f32 %v461, %v462
    %v465 = vperm.slane %v460, 0
    %v467 = vmul.f32 %v49, %v465
    %v468 = vmul.f32 %v50, %v465
    %v469 = vmul.f32 %v51, %v465
    %v470 = vmul.f32 %v52, %v465
    %v471 = vmul.f32 %v53, %v465
    %v472 = vmul.f32 %v54, %v465
    %v473 = vmul.f32 %v55, %v465
    %v474 = vmul.f32 %v56, %v465
    %v475 = vmul.f32 %v57, %v465
    %v476 = vmul.f32 %v58, %v465
    %v477 = vmul.f32 %v59, %v465
    %v478 = vmul.f32 %v60, %v465
    %v479 = vmul.f32 %v61, %v465
    %v480 = vmul.f32 %v62, %v465
    %v481 = vmul.f32 %v63, %v465
    %v482 = vmul.f32 %v64, %v465
    %v483 = vmul.f32 %v65, %v465
    %v484 = vmul.f32 %v66, %v465
    %v485 = vmul.f32 %v67, %v465
    %v486 = vmul.f32 %v68, %v465
    %v487 = vmul.f32 %v69, %v465
    %v488 = vmul.f32 %v70, %v465
    %v489 = vmul.f32 %v71, %v465
    %v490 = vmul.f32 %v72, %v465
    %v491 = vmul.f32 %v73, %v465
    %v492 = vmul.f32 %v74, %v465
    %v493 = vmul.f32 %v75, %v465
    %v494 = vmul.f32 %v76, %v465
    %v495 = vmul.f32 %v77, %v465
    %v496 = vmul.f32 %v78, %v465
    %v497 = vmul.f32 %v79, %v465
    %v498 = vmul.f32 %v80, %v465
    %v499 = vmul.f32 %v81, %v465
    %v500 = vmul.f32 %v82, %v465
    %v501 = vmul.f32 %v83, %v465
    %v502 = vmul.f32 %v84, %v465
    %v503 = vmul.f32 %v85, %v465
    %v504 = vmul.f32 %v86, %v465
    %v505 = vmul.f32 %v87, %v465
    %v506 = vmul.f32 %v88, %v465
    %v507 = vmul.f32 %v89, %v465
    %v508 = vmul.f32 %v90, %v465
    %v509 = vmul.f32 %v91, %v465
    %v510 = vmul.f32 %v92, %v465
    %v511 = vmul.f32 %v93, %v465
    %v512 = vmul.f32 %v94, %v465
    %v513 = vmul.f32 %v95, %v465
    %v514 = vmul.f32 %v96, %v465
    %v515 = vmul.f32 %v97, %v465
    %v516 = vmul.f32 %v98, %v465
    %v517 = vmul.f32 %v99, %v465
    %v518 = vmul.f32 %v100, %v465
    %v519 = vmul.f32 %v101, %v465
    %v520 = vmul.f32 %v102, %v465
    %v521 = vmul.f32 %v103, %v465
    %v522 = vmul.f32 %v104, %v465
    %v523 = vmul.f32 %v105, %v465
    %v524 = vmul.f32 %v106, %v465
    %v525 = vmul.f32 %v107, %v465
    %v526 = vmul.f32 %v108, %v465
    %v527 = vmul.f32 %v109, %v465
    %v528 = vmul.f32 %v110, %v465
    %v529 = vmul.f32 %v111, %v465
    %v530 = vmul.f32 %v112, %v465
    %v532 = vperm.slane %v463, 0
    %v534 = vadd.f32 %v467, %v532
    %v535 = vadd.f32 %v468, %v532
    %v536 = vadd.f32 %v469, %v532
    %v537 = vadd.f32 %v470, %v532
    %v538 = vadd.f32 %v471, %v532
    %v539 = vadd.f32 %v472, %v532
    %v540 = vadd.f32 %v473, %v532
    %v541 = vadd.f32 %v474, %v532
    %v542 = vadd.f32 %v475, %v532
    %v543 = vadd.f32 %v476, %v532
    %v544 = vadd.f32 %v477, %v532
    %v545 = vadd.f32 %v478, %v532
    %v546 = vadd.f32 %v479, %v532
    %v547 = vadd.f32 %v480, %v532
    %v548 = vadd.f32 %v481, %v532
    %v549 = vadd.f32 %v482, %v532
    %v550 = vadd.f32 %v483, %v532
    %v551 = vadd.f32 %v484, %v532
    %v552 = vadd.f32 %v485, %v532
    %v553 = vadd.f32 %v486, %v532
    %v554 = vadd.f32 %v487, %v532
    %v555 = vadd.f32 %v488, %v532
    %v556 = vadd.f32 %v489, %v532
    %v557 = vadd.f32 %v490, %v532
    %v558 = vadd.f32 %v491, %v532
    %v559 = vadd.f32 %v492, %v532
    %v560 = vadd.f32 %v493, %v532
    %v561 = vadd.f32 %v494, %v532
    %v562 = vadd.f32 %v495, %v532
    %v563 = vadd.f32 %v496, %v532
    %v564 = vadd.f32 %v497, %v532
    %v565 = vadd.f32 %v498, %v532
    %v566 = vadd.f32 %v499, %v532
    %v567 = vadd.f32 %v500, %v532
    %v568 = vadd.f32 %v501, %v532
    %v569 = vadd.f32 %v502, %v532
    %v570 = vadd.f32 %v503, %v532
    %v571 = vadd.f32 %v504, %v532
    %v572 = vadd.f32 %v505, %v532
    %v573 = vadd.f32 %v506, %v532
    %v574 = vadd.f32 %v507, %v532
    %v575 = vadd.f32 %v508, %v532
    %v576 = vadd.f32 %v509, %v532
    %v577 = vadd.f32 %v510, %v532
    %v578 = vadd.f32 %v511, %v532
    %v579 = vadd.f32 %v512, %v532
    %v580 = vadd.f32 %v513, %v532
    %v581 = vadd.f32 %v514, %v532
    %v582 = vadd.f32 %v515, %v532
    %v583 = vadd.f32 %v516, %v532
    %v584 = vadd.f32 %v517, %v532
    %v585 = vadd.f32 %v518, %v532
    %v586 = vadd.f32 %v519, %v532
    %v587 = vadd.f32 %v520, %v532
    %v588 = vadd.f32 %v521, %v532
    %v589 = vadd.f32 %v522, %v532
    %v590 = vadd.f32 %v523, %v532
    %v591 = vadd.f32 %v524, %v532
    %v592 = vadd.f32 %v525, %v532
    %v593 = vadd.f32 %v526, %v532
    %v594 = vadd.f32 %v527, %v532
    %v595 = vadd.f32 %v528, %v532
    %v596 = vadd.f32 %v529, %v532
    %v597 = vadd.f32 %v530, %v532
    %v598 = vld [vmem:[#allocation4] sm:$0xff]
    %v599 = vld [vmem:[#allocation4 + $0x8] sm:$0xff]
    %v600 = vld [vmem:[#allocation4 + $0x10] sm:$0xff]
    %v601 = vld [vmem:[#allocation4 + $0x18] sm:$0xff]
    %v603 = vsel %vm113, %v534, 0
    %v606 = vsel %vm113, %v535, 0
    %v609 = vsel %vm113, %v536, 0
    %v612 = vsel %vm113, %v537, 0
    %v615 = vsel %vm113, %v538, 0
    %v618 = vsel %vm113, %v539, 0
    %v621 = vsel %vm113, %v540, 0
    %v624 = vsel %vm113, %v541, 0
    %v627 = vsel %vm113, %v542, 0
    %v630 = vsel %vm113, %v543, 0
    %v633 = vsel %vm113, %v544, 0
    %v636 = vsel %vm113, %v545, 0
    %v639 = vsel %vm113, %v546, 0
    %v642 = vsel %vm113, %v547, 0
    %v645 = vsel %vm113, %v548, 0
    %v648 = vsel %vm113, %v549, 0
    %v651 = vsel %vm113, %v550, 0
    %v654 = vsel %vm113, %v551, 0
    %v657 = vsel %vm113, %v552, 0
    %v660 = vsel %vm113, %v553, 0
    %v663 = vsel %vm113, %v554, 0
    %v666 = vsel %vm113, %v555, 0
    %v669 = vsel %vm113, %v556, 0
    %v672 = vsel %vm113, %v557, 0
    %v675 = vsel %vm113, %v558, 0
    %v678 = vsel %vm113, %v559, 0
    %v681 = vsel %vm113, %v560, 0
    %v684 = vsel %vm113, %v561, 0
    %v687 = vsel %vm113, %v562, 0
    %v690 = vsel %vm113, %v563, 0
    %v693 = vsel %vm113, %v564, 0
    %v696 = vsel %vm113, %v565, 0
    %v699 = vsel %vm113, %v566, 0
    %v702 = vsel %vm113, %v567, 0
    %v705 = vsel %vm113, %v568, 0
    %v708 = vsel %vm113, %v569, 0
    %v711 = vsel %vm113, %v570, 0
    %v714 = vsel %vm113, %v571, 0
    %v717 = vsel %vm113, %v572, 0
    %v720 = vsel %vm113, %v573, 0
    %v723 = vsel %vm113, %v574, 0
    %v726 = vsel %vm113, %v575, 0
    %v729 = vsel %vm113, %v576, 0
    %v732 = vsel %vm113, %v577, 0
    %v735 = vsel %vm113, %v578, 0
    %v738 = vsel %vm113, %v579, 0
    %v741 = vsel %vm113, %v580, 0
    %v744 = vsel %vm113, %v581, 0
    %v747 = vsel %vm113, %v582, 0
    %v750 = vsel %vm113, %v583, 0
    %v753 = vsel %vm113, %v584, 0
    %v756 = vsel %vm113, %v585, 0
    %v759 = vsel %vm113, %v586, 0
    %v762 = vsel %vm113, %v587, 0
    %v765 = vsel %vm113, %v588, 0
    %v768 = vsel %vm113, %v589, 0
    %v771 = vsel %vm113, %v590, 0
    %v774 = vsel %vm113, %v591, 0
    %v777 = vsel %vm113, %v592, 0
    %v780 = vsel %vm113, %v593, 0
    %v783 = vsel %vm113, %v594, 0
    %v786 = vsel %vm113, %v595, 0
    %v789 = vsel %vm113, %v596, 0
    %v792 = vsel %vm113, %v597, 0
    %794 = vmatpush.msra.mxu0 0.0
    %795 = vmatpush.msra.mxu0 0.0
    %796 = vmatpush.msra.mxu0 0.0
    %797 = vmatpush.msra.mxu0 0.0
    %798 = vmatpush.msra.mxu0 0.0
    %799 = vmatpush.msra.mxu0 0.0
    %800 = vmatpush.msra.mxu0 0.0
    %801 = vmatpush.msra.mxu0 0.0
    %802 = vmatpush.msra.mxu0 0.0
    %803 = vmatpush.msra.mxu0 0.0
    %804 = vmatpush.msra.mxu0 0.0
    %805 = vmatpush.msra.mxu0 0.0
    %806 = vmatpush.msra.mxu0 %v601
    %807 = vmatpush.msra.mxu0 %v600
    %808 = vmatpush.msra.mxu0 %v599
    %809 = vmatpush.msra.mxu0 %v598
    %810 = vmatmul.f32.gmra.mxu0 %v603
    %v811 = vpop.f32.mrf.mxu0
    %v812 = vadd.f32 0.0, %v811
    %813 = vmatmul.f32.gmra.mxu0 %v606
    %v814 = vpop.f32.mrf.mxu0
    %v815 = vadd.f32 0.0, %v814
    %816 = vmatmul.f32.gmra.mxu0 %v609
    %v817 = vpop.f32.mrf.mxu0
    %v818 = vadd.f32 0.0, %v817
    %819 = vmatmul.f32.gmra.mxu0 %v612
    %v820 = vpop.f32.mrf.mxu0
    %v821 = vadd.f32 0.0, %v820
    %822 = vmatmul.f32.gmra.mxu0 %v615
    %v823 = vpop.f32.mrf.mxu0
    %v824 = vadd.f32 0.0, %v823
    %825 = vmatmul.f32.gmra.mxu0 %v618
    %v826 = vpop.f32.mrf.mxu0
    %v827 = vadd.f32 0.0, %v826
    %828 = vmatmul.f32.gmra.mxu0 %v621
    %v829 = vpop.f32.mrf.mxu0
    %v830 = vadd.f32 0.0, %v829
    %831 = vmatmul.f32.gmra.mxu0 %v624
    %v832 = vpop.f32.mrf.mxu0
    %v833 = vadd.f32 0.0, %v832
    %834 = vmatmul.f32.gmra.mxu0 %v627
    %v835 = vpop.f32.mrf.mxu0
    %v836 = vadd.f32 0.0, %v835
    %837 = vmatmul.f32.gmra.mxu0 %v630
    %v838 = vpop.f32.mrf.mxu0
    %v839 = vadd.f32 0.0, %v838
    %840 = vmatmul.f32.gmra.mxu0 %v633
    %v841 = vpop.f32.mrf.mxu0
    %v842 = vadd.f32 0.0, %v841
    %843 = vmatmul.f32.gmra.mxu0 %v636
    %v844 = vpop.f32.mrf.mxu0
    %v845 = vadd.f32 0.0, %v844
    %846 = vmatmul.f32.gmra.mxu0 %v639
    %v847 = vpop.f32.mrf.mxu0
    %v848 = vadd.f32 0.0, %v847
    %849 = vmatmul.f32.gmra.mxu0 %v642
    %v850 = vpop.f32.mrf.mxu0
    %v851 = vadd.f32 0.0, %v850
    %852 = vmatmul.f32.gmra.mxu0 %v645
    %v853 = vpop.f32.mrf.mxu0
    %v854 = vadd.f32 0.0, %v853
    %855 = vmatmul.f32.gmra.mxu0 %v648
    %v856 = vpop.f32.mrf.mxu0
    %v857 = vadd.f32 0.0, %v856
    %858 = vmatmul.f32.gmra.mxu0 %v651
    %v859 = vpop.f32.mrf.mxu0
    %v860 = vadd.f32 0.0, %v859
    %861 = vmatmul.f32.gmra.mxu0 %v654
    %v862 = vpop.f32.mrf.mxu0
    %v863 = vadd.f32 0.0, %v862
    %864 = vmatmul.f32.gmra.mxu0 %v657
    %v865 = vpop.f32.mrf.mxu0
    %v866 = vadd.f32 0.0, %v865
    %867 = vmatmul.f32.gmra.mxu0 %v660
    %v868 = vpop.f32.mrf.mxu0
    %v869 = vadd.f32 0.0, %v868
    %870 = vmatmul.f32.gmra.mxu0 %v663
    %v871 = vpop.f32.mrf.mxu0
    %v872 = vadd.f32 0.0, %v871
    %873 = vmatmul.f32.gmra.mxu0 %v666
    %v874 = vpop.f32.mrf.mxu0
    %v875 = vadd.f32 0.0, %v874
    %876 = vmatmul.f32.gmra.mxu0 %v669
    %v877 = vpop.f32.mrf.mxu0
    %v878 = vadd.f32 0.0, %v877
    %879 = vmatmul.f32.gmra.mxu0 %v672
    %v880 = vpop.f32.mrf.mxu0
    %v881 = vadd.f32 0.0, %v880
    %882 = vmatmul.f32.gmra.mxu0 %v675
    %v883 = vpop.f32.mrf.mxu0
    %v884 = vadd.f32 0.0, %v883
    %885 = vmatmul.f32.gmra.mxu0 %v678
    %v886 = vpop.f32.mrf.mxu0
    %v887 = vadd.f32 0.0, %v886
    %888 = vmatmul.f32.gmra.mxu0 %v681
    %v889 = vpop.f32.mrf.mxu0
    %v890 = vadd.f32 0.0, %v889
    %891 = vmatmul.f32.gmra.mxu0 %v684
    %v892 = vpop.f32.mrf.mxu0
    %v893 = vadd.f32 0.0, %v892
    %894 = vmatmul.f32.gmra.mxu0 %v687
    %v895 = vpop.f32.mrf.mxu0
    %v896 = vadd.f32 0.0, %v895
    %897 = vmatmul.f32.gmra.mxu0 %v690
    %v898 = vpop.f32.mrf.mxu0
    %v899 = vadd.f32 0.0, %v898
    %900 = vmatmul.f32.gmra.mxu0 %v693
    %v901 = vpop.f32.mrf.mxu0
    %v902 = vadd.f32 0.0, %v901
    %903 = vmatmul.f32.gmra.mxu0 %v696
    %v904 = vpop.f32.mrf.mxu0
    %v905 = vadd.f32 0.0, %v904
    %906 = vmatmul.f32.gmra.mxu0 %v699
    %v907 = vpop.f32.mrf.mxu0
    %v908 = vadd.f32 0.0, %v907
    %909 = vmatmul.f32.gmra.mxu0 %v702
    %v910 = vpop.f32.mrf.mxu0
    %v911 = vadd.f32 0.0, %v910
    %912 = vmatmul.f32.gmra.mxu0 %v705
    %v913 = vpop.f32.mrf.mxu0
    %v914 = vadd.f32 0.0, %v913
    %915 = vmatmul.f32.gmra.mxu0 %v708
    %v916 = vpop.f32.mrf.mxu0
    %v917 = vadd.f32 0.0, %v916
    %918 = vmatmul.f32.gmra.mxu0 %v711
    %v919 = vpop.f32.mrf.mxu0
    %v920 = vadd.f32 0.0, %v919
    %921 = vmatmul.f32.gmra.mxu0 %v714
    %v922 = vpop.f32.mrf.mxu0
    %v923 = vadd.f32 0.0, %v922
    %924 = vmatmul.f32.gmra.mxu0 %v717
    %v925 = vpop.f32.mrf.mxu0
    %v926 = vadd.f32 0.0, %v925
    %927 = vmatmul.f32.gmra.mxu0 %v720
    %v928 = vpop.f32.mrf.mxu0
    %v929 = vadd.f32 0.0, %v928
    %930 = vmatmul.f32.gmra.mxu0 %v723
    %v931 = vpop.f32.mrf.mxu0
    %v932 = vadd.f32 0.0, %v931
    %933 = vmatmul.f32.gmra.mxu0 %v726
    %v934 = vpop.f32.mrf.mxu0
    %v935 = vadd.f32 0.0, %v934
    %936 = vmatmul.f32.gmra.mxu0 %v729
    %v937 = vpop.f32.mrf.mxu0
    %v938 = vadd.f32 0.0, %v937
    %939 = vmatmul.f32.gmra.mxu0 %v732
    %v940 = vpop.f32.mrf.mxu0
    %v941 = vadd.f32 0.0, %v940
    %942 = vmatmul.f32.gmra.mxu0 %v735
    %v943 = vpop.f32.mrf.mxu0
    %v944 = vadd.f32 0.0, %v943
    %945 = vmatmul.f32.gmra.mxu0 %v738
    %v946 = vpop.f32.mrf.mxu0
    %v947 = vadd.f32 0.0, %v946
    %948 = vmatmul.f32.gmra.mxu0 %v741
    %v949 = vpop.f32.mrf.mxu0
    %v950 = vadd.f32 0.0, %v949
    %951 = vmatmul.f32.gmra.mxu0 %v744
    %v952 = vpop.f32.mrf.mxu0
    %v953 = vadd.f32 0.0, %v952
    %954 = vmatmul.f32.gmra.mxu0 %v747
    %v955 = vpop.f32.mrf.mxu0
    %v956 = vadd.f32 0.0, %v955
    %957 = vmatmul.f32.gmra.mxu0 %v750
    %v958 = vpop.f32.mrf.mxu0
    %v959 = vadd.f32 0.0, %v958
    %960 = vmatmul.f32.gmra.mxu0 %v753
    %v961 = vpop.f32.mrf.mxu0
    %v962 = vadd.f32 0.0, %v961
    %963 = vmatmul.f32.gmra.mxu0 %v756
    %v964 = vpop.f32.mrf.mxu0
    %v965 = vadd.f32 0.0, %v964
    %966 = vmatmul.f32.gmra.mxu0 %v759
    %v967 = vpop.f32.mrf.mxu0
    %v968 = vadd.f32 0.0, %v967
    %969 = vmatmul.f32.gmra.mxu0 %v762
    %v970 = vpop.f32.mrf.mxu0
    %v971 = vadd.f32 0.0, %v970
    %972 = vmatmul.f32.gmra.mxu0 %v765
    %v973 = vpop.f32.mrf.mxu0
    %v974 = vadd.f32 0.0, %v973
    %975 = vmatmul.f32.gmra.mxu0 %v768
    %v976 = vpop.f32.mrf.mxu0
    %v977 = vadd.f32 0.0, %v976
    %978 = vmatmul.f32.gmra.mxu0 %v771
    %v979 = vpop.f32.mrf.mxu0
    %v980 = vadd.f32 0.0, %v979
    %981 = vmatmul.f32.gmra.mxu0 %v774
    %v982 = vpop.f32.mrf.mxu0
    %v983 = vadd.f32 0.0, %v982
    %984 = vmatmul.f32.gmra.mxu0 %v777
    %v985 = vpop.f32.mrf.mxu0
    %v986 = vadd.f32 0.0, %v985
    %987 = vmatmul.f32.gmra.mxu0 %v780
    %v988 = vpop.f32.mrf.mxu0
    %v989 = vadd.f32 0.0, %v988
    %990 = vmatmul.f32.gmra.mxu0 %v783
    %v991 = vpop.f32.mrf.mxu0
    %v992 = vadd.f32 0.0, %v991
    %993 = vmatmul.f32.gmra.mxu0 %v786
    %v994 = vpop.f32.mrf.mxu0
    %v995 = vadd.f32 0.0, %v994
    %996 = vmatmul.f32.gmra.mxu0 %v789
    %v997 = vpop.f32.mrf.mxu0
    %v998 = vadd.f32 0.0, %v997
    %999 = vmatmul.f32.gmra.mxu0 %v792
    %v1000 = vpop.f32.mrf.mxu0
    %v1001 = vadd.f32 0.0, %v1000
    %1002 = vdwg.mxu0
    %vm1003 = vcmask 785408
    %1004 = vst.msk [vmem:[%s4] sm:$0xff] %vm1003, %v812
    %1005 = vst.msk [vmem:[%s4 + $0x8] sm:$0xff] %vm1003, %v815
    %1006 = vst.msk [vmem:[%s4 + $0x10] sm:$0xff] %vm1003, %v818
    %1007 = vst.msk [vmem:[%s4 + $0x18] sm:$0xff] %vm1003, %v821
    %1008 = vst.msk [vmem:[%s4 + $0x20] sm:$0xff] %vm1003, %v824
    %1009 = vst.msk [vmem:[%s4 + $0x28] sm:$0xff] %vm1003, %v827
    %1010 = vst.msk [vmem:[%s4 + $0x30] sm:$0xff] %vm1003, %v830
    %1011 = vst.msk [vmem:[%s4 + $0x38] sm:$0xff] %vm1003, %v833
    %1012 = vst.msk [vmem:[%s4 + $0x40] sm:$0xff] %vm1003, %v836
    %1013 = vst.msk [vmem:[%s4 + $0x48] sm:$0xff] %vm1003, %v839
    %1014 = vst.msk [vmem:[%s4 + $0x50] sm:$0xff] %vm1003, %v842
    %1015 = vst.msk [vmem:[%s4 + $0x58] sm:$0xff] %vm1003, %v845
    %1016 = vst.msk [vmem:[%s4 + $0x60] sm:$0xff] %vm1003, %v848
    %1017 = vst.msk [vmem:[%s4 + $0x68] sm:$0xff] %vm1003, %v851
    %1018 = vst.msk [vmem:[%s4 + $0x70] sm:$0xff] %vm1003, %v854
    %1019 = vst.msk [vmem:[%s4 + $0x78] sm:$0xff] %vm1003, %v857
    %1020 = vst.msk [vmem:[%s4 + $0x80] sm:$0xff] %vm1003, %v860
    %1021 = vst.msk [vmem:[%s4 + $0x88] sm:$0xff] %vm1003, %v863
    %1022 = vst.msk [vmem:[%s4 + $0x90] sm:$0xff] %vm1003, %v866
    %1023 = vst.msk [vmem:[%s4 + $0x98] sm:$0xff] %vm1003, %v869
    %1024 = vst.msk [vmem:[%s4 + $0xa0] sm:$0xff] %vm1003, %v872
    %1025 = vst.msk [vmem:[%s4 + $0xa8] sm:$0xff] %vm1003, %v875
    %1026 = vst.msk [vmem:[%s4 + $0xb0] sm:$0xff] %vm1003, %v878
    %1027 = vst.msk [vmem:[%s4 + $0xb8] sm:$0xff] %vm1003, %v881
    %1028 = vst.msk [vmem:[%s4 + $0xc0] sm:$0xff] %vm1003, %v884
    %1029 = vst.msk [vmem:[%s4 + $0xc8] sm:$0xff] %vm1003, %v887
    %1030 = vst.msk [vmem:[%s4 + $0xd0] sm:$0xff] %vm1003, %v890
    %1031 = vst.msk [vmem:[%s4 + $0xd8] sm:$0xff] %vm1003, %v893
    %1032 = vst.msk [vmem:[%s4 + $0xe0] sm:$0xff] %vm1003, %v896
    %1033 = vst.msk [vmem:[%s4 + $0xe8] sm:$0xff] %vm1003, %v899
    %1034 = vst.msk [vmem:[%s4 + $0xf0] sm:$0xff] %vm1003, %v902
    %1035 = vst.msk [vmem:[%s4 + $0xf8] sm:$0xff] %vm1003, %v905
    %1036 = vst.msk [vmem:[%s4 + $0x100] sm:$0xff] %vm1003, %v908
    %1037 = vst.msk [vmem:[%s4 + $0x108] sm:$0xff] %vm1003, %v911
    %1038 = vst.msk [vmem:[%s4 + $0x110] sm:$0xff] %vm1003, %v914
    %1039 = vst.msk [vmem:[%s4 + $0x118] sm:$0xff] %vm1003, %v917
    %1040 = vst.msk [vmem:[%s4 + $0x120] sm:$0xff] %vm1003, %v920
    %1041 = vst.msk [vmem:[%s4 + $0x128] sm:$0xff] %vm1003, %v923
    %1042 = vst.msk [vmem:[%s4 + $0x130] sm:$0xff] %vm1003, %v926
    %1043 = vst.msk [vmem:[%s4 + $0x138] sm:$0xff] %vm1003, %v929
    %1044 = vst.msk [vmem:[%s4 + $0x140] sm:$0xff] %vm1003, %v932
    %1045 = vst.msk [vmem:[%s4 + $0x148] sm:$0xff] %vm1003, %v935
    %1046 = vst.msk [vmem:[%s4 + $0x150] sm:$0xff] %vm1003, %v938
    %1047 = vst.msk [vmem:[%s4 + $0x158] sm:$0xff] %vm1003, %v941
    %1048 = vst.msk [vmem:[%s4 + $0x160] sm:$0xff] %vm1003, %v944
    %1049 = vst.msk [vmem:[%s4 + $0x168] sm:$0xff] %vm1003, %v947
    %1050 = vst.msk [vmem:[%s4 + $0x170] sm:$0xff] %vm1003, %v950
    %1051 = vst.msk [vmem:[%s4 + $0x178] sm:$0xff] %vm1003, %v953
    %1052 = vst.msk [vmem:[%s4 + $0x180] sm:$0xff] %vm1003, %v956
    %1053 = vst.msk [vmem:[%s4 + $0x188] sm:$0xff] %vm1003, %v959
    %1054 = vst.msk [vmem:[%s4 + $0x190] sm:$0xff] %vm1003, %v962
    %1055 = vst.msk [vmem:[%s4 + $0x198] sm:$0xff] %vm1003, %v965
    %1056 = vst.msk [vmem:[%s4 + $0x1a0] sm:$0xff] %vm1003, %v968
    %1057 = vst.msk [vmem:[%s4 + $0x1a8] sm:$0xff] %vm1003, %v971
    %1058 = vst.msk [vmem:[%s4 + $0x1b0] sm:$0xff] %vm1003, %v974
    %1059 = vst.msk [vmem:[%s4 + $0x1b8] sm:$0xff] %vm1003, %v977
    %1060 = vst.msk [vmem:[%s4 + $0x1c0] sm:$0xff] %vm1003, %v980
    %1061 = vst.msk [vmem:[%s4 + $0x1c8] sm:$0xff] %vm1003, %v983
    %1062 = vst.msk [vmem:[%s4 + $0x1d0] sm:$0xff] %vm1003, %v986
    %1063 = vst.msk [vmem:[%s4 + $0x1d8] sm:$0xff] %vm1003, %v989
    %1064 = vst.msk [vmem:[%s4 + $0x1e0] sm:$0xff] %vm1003, %v992
    %1065 = vst.msk [vmem:[%s4 + $0x1e8] sm:$0xff] %vm1003, %v995
    %1066 = vst.msk [vmem:[%s4 + $0x1f0] sm:$0xff] %vm1003, %v998
    %1067 = vst.msk [vmem:[%s4 + $0x1f8] sm:$0xff] %vm1003, %v1001
    // Predicated region
    $region26: #{self_attention.3} parent=1 // pred_check
      _
    $region27: #{self_attention.3} parent=1 // pred_check_branch
      %1069 = sbr.rel (0) target = $region29
    $region28: #{self_attention.3} parent=1 // pred_region
      _
    $region29: #{self_attention.3} parent=1 // pred_fallthru
      _
    // Predicated region
    $region30: #{self_attention.3} parent=1 // pred_check
      _
    $region31: #{self_attention.3} parent=1 // pred_check_branch
      %1071 = sbr.rel (0) target = $region33
    $region32: #{self_attention.3} parent=1 // pred_region
      _
    $region33: #{self_attention.3} parent=1 // pred_fallthru
      _
    %1072 = vsyncpa [#allocation3], 1
    %1073 = vsyncpa [#allocation5], 1

// kernel: self_attention.5
$region0: #{self_attention.5}
  #allocation0 [shape = 'u32[]', space=smem, size = 0x4, offset = 0x4, fixed_abs, tag = 'smem constant byte address 0x4 - core index']
  #allocation1 [shape = 'u32[72,128]{1,0:T(1,128)}', space=vmem, size = 0x9000, scoped, tag = 'internal scratch']
  %s0 = inlined_call_operand.vmem [shape: f32[2,256,32], index: 0, kind: input, shape index: {}]
  %s1 = inlined_call_operand.vmem [shape: f32[32,32], index: 1, kind: input, shape index: {}]
  %s2 = inlined_call_operand.vmem [shape: f32[1,32], index: 2, kind: input, shape index: {}]
  %s3 = inlined_call_operand.hbm [shape: f32[2,256,32], index: 3, kind: output, shape index: {}]
  %s4 = sld [smem:[#allocation0]]
  $region45: #{self_attention.5} parent=0
    _
  %s6 = ssub.s32 1, %s4
  %s7 = scalar_select 0, %s6, %s4
  $region1: #{self_attention.5} parent=0
    #allocation2 [shape = 'u8[262144]{0}', space=vmem, size = 0x40000, scoped, tag = 'output window, operand 0']
    #allocation3 [shape = 's32[2]{0}', space=sflag, size = 0x8, scoped, tag = 'scoped memory for self_attention.5']
    %8 = vsyncpa [#allocation3], 0
    %s9 = scalar_lea.sflag [#allocation3], 1
    %10 = vsyncpa %s9, 0
    loop: start=0, step=1, limit=4
    $region2: #{self_attention.5} parent=1 // loop_pre_header
      _
    $region3: #{self_attention.5} parent=1 // loop_header
      %s12 = sphi 0, %s16
      %p13 = scmp.ge.s32.totalorder %s12, 4
      %s22 = sphi 0, %s24
      %s25 = sphi 0, %s22
      %s26 = sphi 0, %s25
      %s42 = sphi 0, %s26
      %s46 = sphi 0, %s46
      %s48 = sphi 0, %s46
      %s49 = sphi 0, %s48
      %s63 = sphi 0, %s49
      %s67 = sphi 0, %s67
      %s69 = sphi 0, %s67
      %s70 = sphi 0, %s69
      %s84 = sphi 0, %s70
      %s90 = sphi 0, %s92
      %s93 = sphi 0, %s90
      %s94 = sphi 0, %s93
      %s110 = sphi 0, %s94
    $region4: #{self_attention.5} parent=1 // loop_header_branch
      %15 = sbr.rel (%p13) target = $region8
    $region5: #{self_attention.5} parent=1 // loop_body
      %s17 = ssub.s32 %s12, 1
      %s18 = ssub.s32 %s12, 2
      %s19 = sadd.s32 %s12, 1
      %s20 = ssub.s32 %s12, %s19
      %p21 = scmp.eq.s32.totalorder %s20, 0
      %s23 = sadd.s32 %s22, 1
      %s24 = scalar_select %p21, %s22, %s23
      %p27 = pneg %p21
      %p28 = scmp.eq.s32.totalorder %s12, 1
      %p29 = por %p27, %p28
      %p30 = scmp.ne.s32.totalorder %s22, %s25
      %p31 = scmp.eq.s32.totalorder %s12, 0
      %p32 = por %p30, %p31
      %p33 = scmp.ne.s32.totalorder %s22, %s25
      %p34 = scmp.eq.s32.totalorder %s17, 1
      %p35 = por %p33, %p34
      %p36 = scmp.ne.s32.totalorder %s25, %s26
      %p37 = scmp.eq.s32.totalorder %s17, 0
      %p38 = por %p36, %p37
      %p39 = scmp.ne.s32.totalorder %s25, %s26
      %p40 = scmp.eq.s32.totalorder %s18, 1
      %p41 = por %p39, %p40
      %p43 = scmp.ne.s32.totalorder %s26, %s42
      %p44 = scmp.eq.s32.totalorder %s18, 0
      %p45 = por %p43, %p44
      %s47 = sadd.s32 %s46, 1
      %p50 = scmp.eq.s32.totalorder %s12, 1
      %p51 = scmp.ne.s32.totalorder %s46, %s48
      %p52 = scmp.eq.s32.totalorder %s12, 0
      %p53 = por %p51, %p52
      %p54 = scmp.ne.s32.totalorder %s46, %s48
      %p55 = scmp.eq.s32.totalorder %s17, 1
      %p56 = por %p54, %p55
      %p57 = scmp.ne.s32.totalorder %s48, %s49
      %p58 = scmp.eq.s32.totalorder %s17, 0
      %p59 = por %p57, %p58
      %p60 = scmp.ne.s32.totalorder %s48, %s49
      %p61 = scmp.eq.s32.totalorder %s18, 1
      %p62 = por %p60, %p61
      %p64 = scmp.ne.s32.totalorder %s49, %s63
      %p65 = scmp.eq.s32.totalorder %s18, 0
      %p66 = por %p64, %p65
      %s68 = sadd.s32 %s67, 1
      %p71 = scmp.eq.s32.totalorder %s12, 1
      %p72 = scmp.ne.s32.totalorder %s67, %s69
      %p73 = scmp.eq.s32.totalorder %s12, 0
      %p74 = por %p72, %p73
      %p75 = scmp.ne.s32.totalorder %s67, %s69
      %p76 = scmp.eq.s32.totalorder %s17, 1
      %p77 = por %p75, %p76
      %p78 = scmp.ne.s32.totalorder %s69, %s70
      %p79 = scmp.eq.s32.totalorder %s17, 0
      %p80 = por %p78, %p79
      %p81 = scmp.ne.s32.totalorder %s69, %s70
      %p82 = scmp.eq.s32.totalorder %s18, 1
      %p83 = por %p81, %p82
      %p85 = scmp.ne.s32.totalorder %s70, %s84
      %p86 = scmp.eq.s32.totalorder %s18, 0
      %p87 = por %p85, %p86
      %s88 = ssub.s32 %s12, %s19
      %p89 = scmp.eq.s32.totalorder %s88, 0
      %s91 = sadd.s32 %s90, 1
      %s92 = scalar_select %p89, %s90, %s91
      %p95 = pneg %p89
      %p96 = scmp.eq.s32.totalorder %s12, 1
      %p97 = por %p95, %p96
      %p98 = scmp.ne.s32.totalorder %s90, %s93
      %p99 = scmp.eq.s32.totalorder %s12, 0
      %p100 = por %p98, %p99
      %p101 = scmp.ne.s32.totalorder %s90, %s93
      %p102 = scmp.eq.s32.totalorder %s17, 1
      %p103 = por %p101, %p102
      %p104 = scmp.ne.s32.totalorder %s93, %s94
      %p105 = scmp.eq.s32.totalorder %s17, 0
      %p106 = por %p104, %p105
      %p107 = scmp.ne.s32.totalorder %s93, %s94
      %p108 = scmp.eq.s32.totalorder %s18, 1
      %p109 = por %p107, %p108
      %p111 = scmp.ne.s32.totalorder %s94, %s110
      %p112 = scmp.eq.s32.totalorder %s18, 0
      %p113 = por %p111, %p112
      %p114 = scmp.le.s32.totalorder 1, %s12
      %p115 = scmp.lt.s32.totalorder %s12, 3
      %p116 = pnand %p114, %p115
      %p117 = pneg %p116
      // Predicated region
      $region9: #{self_attention.5} parent=5 // pred_check
        _
      $region10: #{self_attention.5} parent=5 // pred_check_branch
        %119 = sbr.rel (%p116) target = $region12
      $region11: #{self_attention.5} parent=5 // pred_region
        %s120 = ssub.s32 %s12, 1
        // Predicated region
        $region13: #{self_attention.5} parent=11 // pred_check
          %p121 = pneg %p59
        $region14: #{self_attention.5} parent=11 // pred_check_branch
          %123 = sbr.rel (%p121) target = $region16
        $region15: #{self_attention.5} parent=11 // pred_region
          _
        $region16: #{self_attention.5} parent=11 // pred_fallthru
          _
        // Predicated region
        $region17: #{self_attention.5} parent=11 // pred_check
          %p124 = pneg %p80
        $region18: #{self_attention.5} parent=11 // pred_check_branch
          %126 = sbr.rel (%p124) target = $region20
        $region19: #{self_attention.5} parent=11 // pred_region
          _
        $region20: #{self_attention.5} parent=11 // pred_fallthru
          _
      $region12: #{self_attention.5} parent=5 // pred_fallthru
        _
      %p127 = scmp.lt.s32.totalorder %s12, 2
      // Predicated region
      $region21: #{self_attention.5} parent=5 // pred_check
        %p128 = pneg %p127
      $region22: #{self_attention.5} parent=5 // pred_check_branch
        %130 = sbr.rel (%p128) target = $region24
      $region23: #{self_attention.5} parent=5 // pred_region
        // Predicated region
        $region25: #{self_attention.5} parent=23 // pred_check
          %p131 = pneg %p32
        $region26: #{self_attention.5} parent=23 // pred_check_branch
          %133 = sbr.rel (%p131) target = $region28
        $region27: #{self_attention.5} parent=23 // pred_region
          %p134 = scmp.lt.s32.totalorder %s12, 1
          %s135 = scalar_select %p134, %s12, 1
          %s136 = smul.addr %s135, 32
          %s137 = smul.addr %s136, 8
          %s138 = scalar_lea.vmem %s0, %s137
        $region28: #{self_attention.5} parent=23 // pred_fallthru
          _
      $region24: #{self_attention.5} parent=5 // pred_fallthru
        _
      %p139 = scmp.le.s32.totalorder 1, %s12
      %p140 = scmp.lt.s32.totalorder %s12, 3
      %p141 = pnand %p139, %p140
      %p142 = pneg %p141
      // Predicated region
      $region29: #{self_attention.5} parent=5 // pred_check
        _
      $region30: #{self_attention.5} parent=5 // pred_check_branch
        %144 = sbr.rel (%p141) target = $region32
      $region31: #{self_attention.5} parent=5 // pred_region
        %s145 = ssub.s32 %s12, 1
        %p146 = scmp.lt.s32.totalorder %s17, 1
        %s147 = scalar_select %p146, %s17, 1
        %s148 = smul.addr %s147, 32
        %s149 = smul.addr %s148, 8
        %s150 = scalar_lea.vmem %s0, %s149
        %p151 = pneg %p38
        %p152 = pneg %p35
        %p153 = pneg %p59
        %p154 = pneg %p56
        %p155 = pneg %p80
        %p156 = pneg %p77
        %p157 = pneg %p106
        %p158 = pneg %p103
        %s159 = sand.u32 %s93, 1
        %s160 = scalar_lea.sflag [#allocation3], %s159
        %s161 = sand.u32 %s93, 1
        %s162 = smul.addr %s161, 256
        %s163 = scalar_lea.vmem [#allocation2], %s162
        %p164 = scmp.lt.s32.totalorder %s17, 1
        %s165 = scalar_select %p164, %s17, 1
        %s166 = smul.addr %s165, 32
        %s167 = smul.addr %s166, 8
        %s168 = scalar_lea.vmem %s0, %s167
        %v169 = vld [vmem:[%s168] sm:$0xff]
        %v170 = vld [vmem:[%s168 + $0x8] sm:$0xff]
        %v171 = vld [vmem:[%s168 + $0x10] sm:$0xff]
        %v172 = vld [vmem:[%s168 + $0x18] sm:$0xff]
        %v173 = vld [vmem:[%s168 + $0x20] sm:$0xff]
        %v174 = vld [vmem:[%s168 + $0x28] sm:$0xff]
        %v175 = vld [vmem:[%s168 + $0x30] sm:$0xff]
        %v176 = vld [vmem:[%s168 + $0x38] sm:$0xff]
        %v177 = vld [vmem:[%s168 + $0x40] sm:$0xff]
        %v178 = vld [vmem:[%s168 + $0x48] sm:$0xff]
        %v179 = vld [vmem:[%s168 + $0x50] sm:$0xff]
        %v180 = vld [vmem:[%s168 + $0x58] sm:$0xff]
        %v181 = vld [vmem:[%s168 + $0x60] sm:$0xff]
        %v182 = vld [vmem:[%s168 + $0x68] sm:$0xff]
        %v183 = vld [vmem:[%s168 + $0x70] sm:$0xff]
        %v184 = vld [vmem:[%s168 + $0x78] sm:$0xff]
        %v185 = vld [vmem:[%s168 + $0x80] sm:$0xff]
        %v186 = vld [vmem:[%s168 + $0x88] sm:$0xff]
        %v187 = vld [vmem:[%s168 + $0x90] sm:$0xff]
        %v188 = vld [vmem:[%s168 + $0x98] sm:$0xff]
        %v189 = vld [vmem:[%s168 + $0xa0] sm:$0xff]
        %v190 = vld [vmem:[%s168 + $0xa8] sm:$0xff]
        %v191 = vld [vmem:[%s168 + $0xb0] sm:$0xff]
        %v192 = vld [vmem:[%s168 + $0xb8] sm:$0xff]
        %v193 = vld [vmem:[%s168 + $0xc0] sm:$0xff]
        %v194 = vld [vmem:[%s168 + $0xc8] sm:$0xff]
        %v195 = vld [vmem:[%s168 + $0xd0] sm:$0xff]
        %v196 = vld [vmem:[%s168 + $0xd8] sm:$0xff]
        %v197 = vld [vmem:[%s168 + $0xe0] sm:$0xff]
        %v198 = vld [vmem:[%s168 + $0xe8] sm:$0xff]
        %v199 = vld [vmem:[%s168 + $0xf0] sm:$0xff]
        %v200 = vld [vmem:[%s168 + $0xf8] sm:$0xff]
        %v201 = vld [vmem:[%s1] sm:$0xff]
        %v202 = vld [vmem:[%s1 + $0x8] sm:$0xff]
        %v203 = vld [vmem:[%s1 + $0x10] sm:$0xff]
        %v204 = vld [vmem:[%s1 + $0x18] sm:$0xff]
        %v205 = vld [vmem:[%s2] sm:$0x1]
        %v207 = vperm.slane %v205, 0
        %vm209 = vcmask 261120
        %v211 = vsel %vm209, %v169, 0
        %v214 = vsel %vm209, %v170, 0
        %v217 = vsel %vm209, %v171, 0
        %v220 = vsel %vm209, %v172, 0
        %v223 = vsel %vm209, %v173, 0
        %v226 = vsel %vm209, %v174, 0
        %v229 = vsel %vm209, %v175, 0
        %v232 = vsel %vm209, %v176, 0
        %v235 = vsel %vm209, %v177, 0
        %v238 = vsel %vm209, %v178, 0
        %v241 = vsel %vm209, %v179, 0
        %v244 = vsel %vm209, %v180, 0
        %v247 = vsel %vm209, %v181, 0
        %v250 = vsel %vm209, %v182, 0
        %v253 = vsel %vm209, %v183, 0
        %v256 = vsel %vm209, %v184, 0
        %v259 = vsel %vm209, %v185, 0
        %v262 = vsel %vm209, %v186, 0
        %v265 = vsel %vm209, %v187, 0
        %v268 = vsel %vm209, %v188, 0
        %v271 = vsel %vm209, %v189, 0
        %v274 = vsel %vm209, %v190, 0
        %v277 = vsel %vm209, %v191, 0
        %v280 = vsel %vm209, %v192, 0
        %v283 = vsel %vm209, %v193, 0
        %v286 = vsel %vm209, %v194, 0
        %v289 = vsel %vm209, %v195, 0
        %v292 = vsel %vm209, %v196, 0
        %v295 = vsel %vm209, %v197, 0
        %v298 = vsel %vm209, %v198, 0
        %v301 = vsel %vm209, %v199, 0
        %v304 = vsel %vm209, %v200, 0
        %306 = vmatpush.msra.mxu0 0.0
        %307 = vmatpush.msra.mxu0 0.0
        %308 = vmatpush.msra.mxu0 0.0
        %309 = vmatpush.msra.mxu0 0.0
        %310 = vmatpush.msra.mxu0 0.0
        %311 = vmatpush.msra.mxu0 0.0
        %312 = vmatpush.msra.mxu0 0.0
        %313 = vmatpush.msra.mxu0 0.0
        %314 = vmatpush.msra.mxu0 0.0
        %315 = vmatpush.msra.mxu0 0.0
        %316 = vmatpush.msra.mxu0 0.0
        %317 = vmatpush.msra.mxu0 0.0
        %318 = vmatpush.msra.mxu0 %v204
        %319 = vmatpush.msra.mxu0 %v203
        %320 = vmatpush.msra.mxu0 %v202
        %321 = vmatpush.msra.mxu0 %v201
        %322 = vmatmul.f32.gmra.mxu0 %v211
        %v323 = vpop.f32.mrf.mxu0
        %v324 = vadd.f32 %v207, %v323
        %325 = vmatmul.f32.gmra.mxu0 %v214
        %v326 = vpop.f32.mrf.mxu0
        %v327 = vadd.f32 %v207, %v326
        %328 = vmatmul.f32.gmra.mxu0 %v217
        %v329 = vpop.f32.mrf.mxu0
        %v330 = vadd.f32 %v207, %v329
        %331 = vmatmul.f32.gmra.mxu0 %v220
        %v332 = vpop.f32.mrf.mxu0
        %v333 = vadd.f32 %v207, %v332
        %334 = vmatmul.f32.gmra.mxu0 %v223
        %v335 = vpop.f32.mrf.mxu0
        %v336 = vadd.f32 %v207, %v335
        %337 = vmatmul.f32.gmra.mxu0 %v226
        %v338 = vpop.f32.mrf.mxu0
        %v339 = vadd.f32 %v207, %v338
        %340 = vmatmul.f32.gmra.mxu0 %v229
        %v341 = vpop.f32.mrf.mxu0
        %v342 = vadd.f32 %v207, %v341
        %343 = vmatmul.f32.gmra.mxu0 %v232
        %v344 = vpop.f32.mrf.mxu0
        %v345 = vadd.f32 %v207, %v344
        %346 = vmatmul.f32.gmra.mxu0 %v235
        %v347 = vpop.f32.mrf.mxu0
        %v348 = vadd.f32 %v207, %v347
        %349 = vmatmul.f32.gmra.mxu0 %v238
        %v350 = vpop.f32.mrf.mxu0
        %v351 = vadd.f32 %v207, %v350
        %352 = vmatmul.f32.gmra.mxu0 %v241
        %v353 = vpop.f32.mrf.mxu0
        %v354 = vadd.f32 %v207, %v353
        %355 = vmatmul.f32.gmra.mxu0 %v244
        %v356 = vpop.f32.mrf.mxu0
        %v357 = vadd.f32 %v207, %v356
        %358 = vmatmul.f32.gmra.mxu0 %v247
        %v359 = vpop.f32.mrf.mxu0
        %v360 = vadd.f32 %v207, %v359
        %361 = vmatmul.f32.gmra.mxu0 %v250
        %v362 = vpop.f32.mrf.mxu0
        %v363 = vadd.f32 %v207, %v362
        %364 = vmatmul.f32.gmra.mxu0 %v253
        %v365 = vpop.f32.mrf.mxu0
        %v366 = vadd.f32 %v207, %v365
        %367 = vmatmul.f32.gmra.mxu0 %v256
        %v368 = vpop.f32.mrf.mxu0
        %v369 = vadd.f32 %v207, %v368
        %370 = vmatmul.f32.gmra.mxu0 %v259
        %v371 = vpop.f32.mrf.mxu0
        %v372 = vadd.f32 %v207, %v371
        %373 = vmatmul.f32.gmra.mxu0 %v262
        %v374 = vpop.f32.mrf.mxu0
        %v375 = vadd.f32 %v207, %v374
        %376 = vmatmul.f32.gmra.mxu0 %v265
        %v377 = vpop.f32.mrf.mxu0
        %v378 = vadd.f32 %v207, %v377
        %379 = vmatmul.f32.gmra.mxu0 %v268
        %v380 = vpop.f32.mrf.mxu0
        %v381 = vadd.f32 %v207, %v380
        %382 = vmatmul.f32.gmra.mxu0 %v271
        %v383 = vpop.f32.mrf.mxu0
        %v384 = vadd.f32 %v207, %v383
        %385 = vmatmul.f32.gmra.mxu0 %v274
        %v386 = vpop.f32.mrf.mxu0
        %v387 = vadd.f32 %v207, %v386
        %388 = vmatmul.f32.gmra.mxu0 %v277
        %v389 = vpop.f32.mrf.mxu0
        %v390 = vadd.f32 %v207, %v389
        %391 = vmatmul.f32.gmra.mxu0 %v280
        %v392 = vpop.f32.mrf.mxu0
        %v393 = vadd.f32 %v207, %v392
        %394 = vmatmul.f32.gmra.mxu0 %v283
        %v395 = vpop.f32.mrf.mxu0
        %v396 = vadd.f32 %v207, %v395
        %397 = vmatmul.f32.gmra.mxu0 %v286
        %v398 = vpop.f32.mrf.mxu0
        %v399 = vadd.f32 %v207, %v398
        %400 = vmatmul.f32.gmra.mxu0 %v289
        %v401 = vpop.f32.mrf.mxu0
        %v402 = vadd.f32 %v207, %v401
        %403 = vmatmul.f32.gmra.mxu0 %v292
        %v404 = vpop.f32.mrf.mxu0
        %v405 = vadd.f32 %v207, %v404
        %406 = vmatmul.f32.gmra.mxu0 %v295
        %v407 = vpop.f32.mrf.mxu0
        %v408 = vadd.f32 %v207, %v407
        %409 = vmatmul.f32.gmra.mxu0 %v298
        %v410 = vpop.f32.mrf.mxu0
        %v411 = vadd.f32 %v207, %v410
        %412 = vmatmul.f32.gmra.mxu0 %v301
        %v413 = vpop.f32.mrf.mxu0
        %v414 = vadd.f32 %v207, %v413
        %415 = vmatmul.f32.gmra.mxu0 %v304
        %v416 = vpop.f32.mrf.mxu0
        %v417 = vadd.f32 %v207, %v416
        %418 = vdwg.mxu0
        %419 = vst.msk [vmem:[%s163] sm:$0xff] %vm209, %v324
        %420 = vst.msk [vmem:[%s163 + $0x8] sm:$0xff] %vm209, %v327
        %421 = vst.msk [vmem:[%s163 + $0x10] sm:$0xff] %vm209, %v330
        %422 = vst.msk [vmem:[%s163 + $0x18] sm:$0xff] %vm209, %v333
        %423 = vst.msk [vmem:[%s163 + $0x20] sm:$0xff] %vm209, %v336
        %424 = vst.msk [vmem:[%s163 + $0x28] sm:$0xff] %vm209, %v339
        %425 = vst.msk [vmem:[%s163 + $0x30] sm:$0xff] %vm209, %v342
        %426 = vst.msk [vmem:[%s163 + $0x38] sm:$0xff] %vm209, %v345
        %427 = vst.msk [vmem:[%s163 + $0x40] sm:$0xff] %vm209, %v348
        %428 = vst.msk [vmem:[%s163 + $0x48] sm:$0xff] %vm209, %v351
        %429 = vst.msk [vmem:[%s163 + $0x50] sm:$0xff] %vm209, %v354
        %430 = vst.msk [vmem:[%s163 + $0x58] sm:$0xff] %vm209, %v357
        %431 = vst.msk [vmem:[%s163 + $0x60] sm:$0xff] %vm209, %v360
        %432 = vst.msk [vmem:[%s163 + $0x68] sm:$0xff] %vm209, %v363
        %433 = vst.msk [vmem:[%s163 + $0x70] sm:$0xff] %vm209, %v366
        %434 = vst.msk [vmem:[%s163 + $0x78] sm:$0xff] %vm209, %v369
        %435 = vst.msk [vmem:[%s163 + $0x80] sm:$0xff] %vm209, %v372
        %436 = vst.msk [vmem:[%s163 + $0x88] sm:$0xff] %vm209, %v375
        %437 = vst.msk [vmem:[%s163 + $0x90] sm:$0xff] %vm209, %v378
        %438 = vst.msk [vmem:[%s163 + $0x98] sm:$0xff] %vm209, %v381
        %439 = vst.msk [vmem:[%s163 + $0xa0] sm:$0xff] %vm209, %v384
        %440 = vst.msk [vmem:[%s163 + $0xa8] sm:$0xff] %vm209, %v387
        %441 = vst.msk [vmem:[%s163 + $0xb0] sm:$0xff] %vm209, %v390
        %442 = vst.msk [vmem:[%s163 + $0xb8] sm:$0xff] %vm209, %v393
        %443 = vst.msk [vmem:[%s163 + $0xc0] sm:$0xff] %vm209, %v396
        %444 = vst.msk [vmem:[%s163 + $0xc8] sm:$0xff] %vm209, %v399
        %445 = vst.msk [vmem:[%s163 + $0xd0] sm:$0xff] %vm209, %v402
        %446 = vst.msk [vmem:[%s163 + $0xd8] sm:$0xff] %vm209, %v405
        %447 = vst.msk [vmem:[%s163 + $0xe0] sm:$0xff] %vm209, %v408
        %448 = vst.msk [vmem:[%s163 + $0xe8] sm:$0xff] %vm209, %v411
        %449 = vst.msk [vmem:[%s163 + $0xf0] sm:$0xff] %vm209, %v414
        %450 = vst.msk [vmem:[%s163 + $0xf8] sm:$0xff] %vm209, %v417
        %s451 = sand.u32 %s93, 1
        %s452 = scalar_lea.sflag [#allocation3], %s451
        %s453 = sand.u32 %s93, 1
        %s454 = smul.addr %s453, 256
        %s455 = scalar_lea.vmem [#allocation2], %s454
        // Predicated region
        $region33: #{self_attention.5} parent=31 // pred_check
          %p456 = pneg %p103
        $region34: #{self_attention.5} parent=31 // pred_check_branch
          %458 = sbr.rel (%p456) target = $region36
        $region35: #{self_attention.5} parent=31 // pred_region
          %460 = vsyncadd %s452, 0
          %s461 = smul.addr %s17, 32
          %s462 = smul.addr %s461, 8
          %s463 = scalar_lea.hbm %s3, %s462
          %s464 = sshll.u32 %s455, 4
          %s465 = int_to_ptr.vmem [resolvable:$true] %s464
          %s466 = sshll.u32 %s463, 4
          %s467 = int_to_ptr.hbm [resolvable:$true] %s466
          %472 = dma.vmem_to_hbm [thread:$0]  %s465, 4096, %s467, %s452, 128, 128, 8
        $region36: #{self_attention.5} parent=31 // pred_fallthru
          _
      $region32: #{self_attention.5} parent=5 // pred_fallthru
        _
      %p473 = scmp.le.s32.totalorder 2, %s12
      // Predicated region
      $region37: #{self_attention.5} parent=5 // pred_check
        %p474 = pneg %p473
      $region38: #{self_attention.5} parent=5 // pred_check_branch
        %476 = sbr.rel (%p474) target = $region40
      $region39: #{self_attention.5} parent=5 // pred_region
        %s477 = ssub.s32 %s12, 2
        // Predicated region
        $region41: #{self_attention.5} parent=39 // pred_check
          %p478 = pneg %p109
        $region42: #{self_attention.5} parent=39 // pred_check_branch
          %480 = sbr.rel (%p478) target = $region44
        $region43: #{self_attention.5} parent=39 // pred_region
          %s481 = sand.u32 %s94, 1
          %s482 = scalar_lea.sflag [#allocation3], %s481
          %s483 = sand.u32 %s94, 1
          %s484 = smul.addr %s483, 256
          %s485 = scalar_lea.vmem [#allocation2], %s484
          %487 = dma.done %s482, 4096
        $region44: #{self_attention.5} parent=39 // pred_fallthru
          _
      $region40: #{self_attention.5} parent=5 // pred_fallthru
        _
    $region6: #{self_attention.5} parent=1 // loop_footer
      %s16 = sadd.s32 1, %s12
    $region7: #{self_attention.5} parent=1 // loop_footer_branch
      %11 = sbr.rel target = $region3
    $region8: #{self_attention.5} parent=1 // loop_exit
      _
    %488 = vsyncpa [#allocation3], 1
    %s489 = scalar_lea.sflag [#allocation3], 1
    %490 = vsyncpa %s489, 1

</llo_original>
